<compile_context>
chip_gen: v7x
topology: tpu7x:2x2x1
jax: 0.10.0
libtpu: 0.0.40
codegen_flags: <defaults>
</compile_context>

<pallas_src>
import functools

import jax
import jax.numpy as jnp
from jax import lax
from jax.experimental import pallas as pl
from jax.experimental.pallas import tpu as pltpu


def _round_up(x, m):
    return ((x + m - 1) // m) * m


def _neural_mf_kernel(u_ref, m_ref, utab_ref, itab_ref,
                      w1u_ref, w1m_ref, b1_ref, w2_ref, b2_ref, w3_ref, b3_ref,
                      wg_ref, w4_ref, c_ref, out_ref):
    """One batch tile, transposed layout: activations are (features, TB), batch on lanes."""
    f32 = jnp.float32
    bf16 = jnp.bfloat16
    L = wg_ref.shape[0]
    TB = u_ref.shape[-1]

    uidx = u_ref[0]                                             # (1, TB) int32
    midx = m_ref[0]                                             # (1, TB) int32

    # ---- In-kernel embedding gather via one-hot bf16 MXU matmuls (tables pinned in VMEM).
    U = utab_ref.shape[1]
    I = itab_ref.shape[1]
    u_oh = jnp.where(lax.broadcasted_iota(jnp.int32, (U, TB), 0) == uidx, 1.0, 0.0).astype(bf16)
    m_oh = jnp.where(lax.broadcasted_iota(jnp.int32, (I, TB), 0) == midx, 1.0, 0.0).astype(bf16)
    xu = jnp.dot(utab_ref[...], u_oh, preferred_element_type=f32)   # (2L, TB): [um ; ug]
    xi = jnp.dot(itab_ref[...], m_oh, preferred_element_type=f32)   # (2L, TB): [mm ; mg]

    # ---- GMF branch: elementwise product of the GMF halves (exact bf16 values in f32).
    prod = xu[L:2 * L] * xi[L:2 * L]                                # (L, TB) f32

    # ---- MLP branch: bf16 operands, f32 accumulation; biases broadcast along lanes.
    um = xu[0:L].astype(bf16)
    mm = xi[0:L].astype(bf16)
    h1 = (jnp.dot(w1u_ref[...], um, preferred_element_type=f32)
          + jnp.dot(w1m_ref[...], mm, preferred_element_type=f32) + b1_ref[...])
    h1 = jnp.maximum(h1, 0.0)                                       # (H1, TB)
    h2 = jnp.maximum(
        jnp.dot(w2_ref[...], h1.astype(bf16), preferred_element_type=f32) + b2_ref[...], 0.0)
    h3 = jnp.maximum(
        jnp.dot(w3_ref[...], h2.astype(bf16), preferred_element_type=f32) + b3_ref[...], 0.0)

    # ---- Folded NeuMF head: VPU multiply + sublane reduction -> lane-dense (1, TB) result.
    gmf_row = jnp.sum(prod * wg_ref[...], axis=0, keepdims=True)    # (1, TB)
    mlp_row = jnp.sum(h3 * w4_ref[...], axis=0, keepdims=True)      # (1, TB)
    out_ref[0] = jax.nn.sigmoid(gmf_row + mlp_row + c_ref[0])


def neural_mf_forward(users, movies, params, block_rows=2048):
    """Fully fused NeuMF forward: indices in, probabilities out, one pallas_call."""
    p = params
    L = p["wg_col"].shape[0]
    B = users.shape[0]

    # Fused-gather path requires the pinned tables (and the per-tile one-hot) to stay small.
    # TODO(synk): large-vocabulary fallback (XLA gather + slab-variant kernel) not implemented.
    assert p["user_tab_T"].shape[1] <= 4096 and p["item_tab_T"].shape[1] <= 4096, \
        "embedding tables too large to pin in VMEM for the fused-gather kernel"

    # Batch tile: big (amortizes ~0.35us grid-step overhead), lane-aligned, and split into >=2
    # tiles when the batch is large enough so the 'parallel' axis can feed both v7x TensorCores.
    lane = 128 if B >= 128 else 8
    TB = min(block_rows, _round_up(B, lane))
    if pl.cdiv(B, TB) < 2 and TB >= 512:
        TB = _round_up((TB + 1) // 2, lane)
    nt = pl.cdiv(B, TB)
    B_pad = nt * TB

    # Pad the tiny int32 index vectors (NOT a gathered slab) and tile them as (nt, 1, TB).
    def tile_idx(idx):
        idx = idx.astype(jnp.int32)
        if B_pad != B:
            idx = jnp.pad(idx, (0, B_pad - B))   # padded rows use index 0 (valid), dropped below
        return idx.reshape(nt, 1, TB)

    u_t, m_t = tile_idx(users), tile_idx(movies)

    def pinned(arr):   # full-array block, constant index_map -> fetched once, stays resident
        nd = arr.ndim
        return pl.BlockSpec(arr.shape, lambda i: (0,) * nd)

    out = pl.pallas_call(
        _neural_mf_kernel,
        out_shape=jax.ShapeDtypeStruct((nt, 1, TB), jnp.float32),
        grid=(nt,),
        in_specs=[
            pl.BlockSpec((1, 1, TB), lambda i: (i, 0, 0)),          # user indices (streamed)
            pl.BlockSpec((1, 1, TB), lambda i: (i, 0, 0)),          # movie indices (streamed)
            pinned(p["user_tab_T"]), pinned(p["item_tab_T"]),
            pinned(p["w1u"]), pinned(p["w1m"]), pinned(p["b1"]),
            pinned(p["w2"]), pinned(p["b2"]),
            pinned(p["w3"]), pinned(p["b3"]),
            pinned(p["wg_col"]), pinned(p["w4_col"]),
            pl.BlockSpec(memory_space=pltpu.MemorySpace.SMEM),      # folded head bias c
        ],
        out_specs=pl.BlockSpec((1, 1, TB), lambda i: (i, 0, 0)),    # lane-dense per-tile result
        compiler_params=pltpu.CompilerParams(
            dimension_semantics=("parallel",),        # megacore: shard batch tiles across TCs
            vmem_limit_bytes=32 * 1024 * 1024,        # portable budget across v5e/v6e/v7x
        ),
    )(u_t, m_t, p["user_tab_T"], p["item_tab_T"],
      p["w1u"], p["w1m"], p["b1"], p["w2"], p["b2"], p["w3"], p["b3"],
      p["wg_col"], p["w4_col"], p["c"])

    return out.reshape(B_pad, 1)[:B]


def init_params(key, num_users, num_items, latent_dims, alpha=0.5):
    """Synthetic NEURAL_MF(top_depth=1) parameters, pre-laid-out for the fused kernel."""
    L = latent_dims
    H1, H2, H3 = 2 * L, L, max(L // 2, 1)
    ks = jax.random.split(key, 16)
    n = lambda k, shape, s=0.1: (s * jax.random.normal(k, shape)).astype(jnp.float32)

    gmf_user, gmf_item = n(ks[0], (num_users, L)), n(ks[1], (num_items, L))
    mlp_user, mlp_item = n(ks[4], (num_users, L)), n(ks[5], (num_items, L))
    wg, bg = n(ks[2], (1, L)) * alpha, n(ks[3], (1,))          # gmf.linear (weight pre-scaled)
    w1, b1 = n(ks[6], (H1, 2 * L)), n(ks[8], (H1,))            # mlp.l1 over [um ; mm]
    w2, b2 = n(ks[9], (H2, H1)), n(ks[10], (H2,))
    w3, b3 = n(ks[11], (H3, H2)), n(ks[12], (H3,))
    w4, b4 = n(ks[13], (1, H3)) * (1.0 - alpha), n(ks[14], (1,))   # mlp.l4 (weight pre-scaled)
    wf, bf = n(ks[15], (1, 2)), jnp.zeros((1,), jnp.float32)       # NeuMF head Linear(2, 1)

    # Transposed bf16 embedding tables: rows [0:L] = MLP half, rows [L:2L] = GMF half,
    # columns = vocabulary (zero-padded to a multiple of 8 sublanes of the one-hot operand).
    def table(mlp_emb, gmf_emb):
        tab = jnp.concatenate([mlp_emb.T, gmf_emb.T], axis=0).astype(jnp.bfloat16)  # (2L, V)
        V = tab.shape[1]
        return jnp.pad(tab, ((0, 0), (0, _round_up(V, 8) - V)))

    wf0, wf1 = wf[0, 0], wf[0, 1]
    return {
        "user_tab_T": table(mlp_user, gmf_user),
        "item_tab_T": table(mlp_item, gmf_item),
        "w1u": w1[:, :L].astype(jnp.bfloat16),        # (H1, L): applied to the user MLP half
        "w1m": w1[:, L:].astype(jnp.bfloat16),        # (H1, L): applied to the item MLP half
        "b1": b1.reshape(H1, 1),
        "w2": w2.astype(jnp.bfloat16), "b2": b2.reshape(H2, 1),
        "w3": w3.astype(jnp.bfloat16), "b3": b3.reshape(H3, 1),
        # NeuMF head folded into the two top weight rows + one scalar bias:
        "wg_col": (wf0 * wg[0]).reshape(L, 1),
        "w4_col": (wf1 * w4[0]).reshape(H3, 1),
        "c": (wf0 * bg + wf1 * b4 + bf).reshape(1),
    }


def neural_mf_reference(users, movies, p):
    """Pure-JAX f32 reference using the same stored bf16 params and the same bf16 rounding points."""
    f32 = jnp.float32
    L = p["wg_col"].shape[0]
    with jax.default_matmul_precision("highest"):      # scoped to the reference only
        xu = p["user_tab_T"].astype(f32).T[users]      # (B, 2L): [um | ug]
        xi = p["item_tab_T"].astype(f32).T[movies]     # (B, 2L): [mm | mg]
        um, ug = xu[:, :L], xu[:, L:]
        mm, mg = xi[:, :L], xi[:, L:]
        rb = lambda x: x.astype(jnp.bfloat16).astype(f32)   # model the kernel's bf16 activations
        h1 = jax.nn.relu(um @ p["w1u"].astype(f32).T + mm @ p["w1m"].astype(f32).T + p["b1"][:, 0])
        h2 = jax.nn.relu(rb(h1) @ p["w2"].astype(f32).T + p["b2"][:, 0])
        h3 = jax.nn.relu(rb(h2) @ p["w3"].astype(f32).T + p["b3"][:, 0])
        gmf = (ug * mg) @ p["wg_col"][:, 0]
        mlp = h3 @ p["w4_col"][:, 0]
        return jax.nn.sigmoid(gmf + mlp + p["c"][0])[:, None]


if __name__ == "__main__":
    num_users, num_items, latent_dims, batch = 10, 12, 32, 40

    key = jax.random.PRNGKey(0)
    pkey, ukey, mkey = jax.random.split(key, 3)
    params = init_params(pkey, num_users, num_items, latent_dims, alpha=0.5)

    users = jax.random.randint(ukey, (batch,), 0, num_users, dtype=jnp.int32)
    movies = jax.random.randint(mkey, (batch,), 0, num_items, dtype=jnp.int32)

    # small block_rows so the demo exercises the multi-tile grid + ragged-batch padding
    fwd = jax.jit(functools.partial(neural_mf_forward, block_rows=16))
    out = jax.block_until_ready(fwd(users, movies, params))

    ref = neural_mf_reference(users, movies, params)
    assert out.shape == (batch, 1), out.shape
    assert jnp.allclose(out, ref, atol=1e-5, rtol=1e-5), (out, ref)
    print("KERNEL_OK")
</pallas_src>

<mosaic_0001>
module attributes {stable_mosaic.version = 11 : i64} {
  func.func @_neural_mf_kernel(%arg0: i32, %arg1: memref<1x1x16xi32, #tpu.memory_space<vmem>>, %arg2: memref<1x1x16xi32, #tpu.memory_space<vmem>>, %arg3: memref<64x16xbf16, #tpu.memory_space<vmem>>, %arg4: memref<64x16xbf16, #tpu.memory_space<vmem>>, %arg5: memref<64x32xbf16, #tpu.memory_space<vmem>>, %arg6: memref<64x32xbf16, #tpu.memory_space<vmem>>, %arg7: memref<64x1xf32, #tpu.memory_space<vmem>>, %arg8: memref<32x64xbf16, #tpu.memory_space<vmem>>, %arg9: memref<32x1xf32, #tpu.memory_space<vmem>>, %arg10: memref<16x32xbf16, #tpu.memory_space<vmem>>, %arg11: memref<16x1xf32, #tpu.memory_space<vmem>>, %arg12: memref<32x1xf32, #tpu.memory_space<vmem>>, %arg13: memref<16x1xf32, #tpu.memory_space<vmem>>, %arg14: memref<1xf32, #tpu.memory_space<smem>>, %arg15: memref<1x1x16xf32, #tpu.memory_space<vmem>>) attributes {dimension_semantics = [#tpu.dimension_semantics<parallel>], iteration_bounds = array<i64: 3>, scalar_prefetch = 0 : i64, scratch_operands = 0 : i64, tpu.core_type = #tpu.core_type<tc>, window_params = [{transform_indices = @transform_0, window_bounds = array<i64: 1, 1, 16>}, {transform_indices = @transform_1, window_bounds = array<i64: 1, 1, 16>}, {pipeline_mode = #tpu.pipeline_mode<synchronous>, transform_indices = @transform_2, window_bounds = array<i64: 64, 16>}, {pipeline_mode = #tpu.pipeline_mode<synchronous>, transform_indices = @transform_3, window_bounds = array<i64: 64, 16>}, {pipeline_mode = #tpu.pipeline_mode<synchronous>, transform_indices = @transform_4, window_bounds = array<i64: 64, 32>}, {pipeline_mode = #tpu.pipeline_mode<synchronous>, transform_indices = @transform_5, window_bounds = array<i64: 64, 32>}, {pipeline_mode = #tpu.pipeline_mode<synchronous>, transform_indices = @transform_6, window_bounds = array<i64: 64, 1>}, {pipeline_mode = #tpu.pipeline_mode<synchronous>, transform_indices = @transform_7, window_bounds = array<i64: 32, 64>}, {pipeline_mode = #tpu.pipeline_mode<synchronous>, transform_indices = @transform_8, window_bounds = array<i64: 32, 1>}, {pipeline_mode = #tpu.pipeline_mode<synchronous>, transform_indices = @transform_9, window_bounds = array<i64: 16, 32>}, {pipeline_mode = #tpu.pipeline_mode<synchronous>, transform_indices = @transform_10, window_bounds = array<i64: 16, 1>}, {pipeline_mode = #tpu.pipeline_mode<synchronous>, transform_indices = @transform_11, window_bounds = array<i64: 32, 1>}, {pipeline_mode = #tpu.pipeline_mode<synchronous>, transform_indices = @transform_12, window_bounds = array<i64: 16, 1>}, {transform_indices = @transform_13, window_bounds = array<i64: 1>}, {transform_indices = @transform_14, window_bounds = array<i64: 1, 1, 16>}]} {
    %c0 = arith.constant 0 : index
    %c0_0 = arith.constant 0 : index
    %c0_1 = arith.constant 0 : index
    %0 = vector.load %arg1[%c0, %c0_0, %c0_1] : memref<1x1x16xi32, #tpu.memory_space<vmem>>, vector<1x1x16xi32>
    %1 = vector.shape_cast %0 : vector<1x1x16xi32> to vector<1x16xi32>
    %c0_2 = arith.constant 0 : index
    %c0_3 = arith.constant 0 : index
    %c0_4 = arith.constant 0 : index
    %2 = vector.load %arg2[%c0_2, %c0_3, %c0_4] : memref<1x1x16xi32, #tpu.memory_space<vmem>>, vector<1x1x16xi32>
    %3 = vector.shape_cast %2 : vector<1x1x16xi32> to vector<1x16xi32>
    %4 = tpu.iota {dimensions = array<i32: 0>} : vector<16x16xi32>
    %5 = vector.broadcast %1 : vector<1x16xi32> to vector<16x16xi32>
    %6 = arith.cmpi eq, %4, %5 : vector<16x16xi32>
    %cst = arith.constant 1.000000e+00 : f32
    %cst_5 = arith.constant 0.000000e+00 : f32
    %7 = vector.broadcast %cst : f32 to vector<16x16xf32>
    %8 = vector.broadcast %cst_5 : f32 to vector<16x16xf32>
    %9 = arith.select %6, %7, %8 : vector<16x16xi1>, vector<16x16xf32>
    %10 = arith.truncf %9 : vector<16x16xf32> to vector<16x16xbf16>
    %11 = tpu.iota {dimensions = array<i32: 0>} : vector<16x16xi32>
    %12 = vector.broadcast %3 : vector<1x16xi32> to vector<16x16xi32>
    %13 = arith.cmpi eq, %11, %12 : vector<16x16xi32>
    %cst_6 = arith.constant 1.000000e+00 : f32
    %cst_7 = arith.constant 0.000000e+00 : f32
    %14 = vector.broadcast %cst_6 : f32 to vector<16x16xf32>
    %15 = vector.broadcast %cst_7 : f32 to vector<16x16xf32>
    %16 = arith.select %13, %14, %15 : vector<16x16xi1>, vector<16x16xf32>
    %17 = arith.truncf %16 : vector<16x16xf32> to vector<16x16xbf16>
    %c0_8 = arith.constant 0 : index
    %c0_9 = arith.constant 0 : index
    %18 = vector.load %arg3[%c0_8, %c0_9] : memref<64x16xbf16, #tpu.memory_space<vmem>>, vector<64x16xbf16>
    %cst_10 = arith.constant dense<0.000000e+00> : vector<64x16xf32>
    %19 = tpu.matmul %18, %10, %cst_10 {dimension_numbers = #tpu.dot_dimension_numbers<[1], [0], [0], [1], [0, 0, 1, 1], [], []>} : vector<64x16xbf16>, vector<16x16xbf16>, vector<64x16xf32> -> vector<64x16xf32>
    %c0_11 = arith.constant 0 : index
    %c0_12 = arith.constant 0 : index
    %20 = vector.load %arg4[%c0_11, %c0_12] : memref<64x16xbf16, #tpu.memory_space<vmem>>, vector<64x16xbf16>
    %cst_13 = arith.constant dense<0.000000e+00> : vector<64x16xf32>
    %21 = tpu.matmul %20, %17, %cst_13 {dimension_numbers = #tpu.dot_dimension_numbers<[1], [0], [0], [1], [0, 0, 1, 1], [], []>} : vector<64x16xbf16>, vector<16x16xbf16>, vector<64x16xf32> -> vector<64x16xf32>
    %22 = vector.extract_strided_slice %19 {offsets = [32, 0], sizes = [32, 16], strides = [1, 1]} : vector<64x16xf32> to vector<32x16xf32>
    %23 = vector.extract_strided_slice %21 {offsets = [32, 0], sizes = [32, 16], strides = [1, 1]} : vector<64x16xf32> to vector<32x16xf32>
    %24 = arith.mulf %22, %23 : vector<32x16xf32>
    %25 = vector.extract_strided_slice %19 {offsets = [0, 0], sizes = [32, 16], strides = [1, 1]} : vector<64x16xf32> to vector<32x16xf32>
    %26 = arith.truncf %25 : vector<32x16xf32> to vector<32x16xbf16>
    %27 = vector.extract_strided_slice %21 {offsets = [0, 0], sizes = [32, 16], strides = [1, 1]} : vector<64x16xf32> to vector<32x16xf32>
    %28 = arith.truncf %27 : vector<32x16xf32> to vector<32x16xbf16>
    %c0_14 = arith.constant 0 : index
    %c0_15 = arith.constant 0 : index
    %29 = vector.load %arg5[%c0_14, %c0_15] : memref<64x32xbf16, #tpu.memory_space<vmem>>, vector<64x32xbf16>
    %cst_16 = arith.constant dense<0.000000e+00> : vector<64x16xf32>
    %30 = tpu.matmul %29, %26, %cst_16 {dimension_numbers = #tpu.dot_dimension_numbers<[1], [0], [0], [1], [0, 0, 1, 1], [], []>} : vector<64x32xbf16>, vector<32x16xbf16>, vector<64x16xf32> -> vector<64x16xf32>
    %c0_17 = arith.constant 0 : index
    %c0_18 = arith.constant 0 : index
    %31 = vector.load %arg6[%c0_17, %c0_18] : memref<64x32xbf16, #tpu.memory_space<vmem>>, vector<64x32xbf16>
    %cst_19 = arith.constant dense<0.000000e+00> : vector<64x16xf32>
    %32 = tpu.matmul %31, %28, %cst_19 {dimension_numbers = #tpu.dot_dimension_numbers<[1], [0], [0], [1], [0, 0, 1, 1], [], []>} : vector<64x32xbf16>, vector<32x16xbf16>, vector<64x16xf32> -> vector<64x16xf32>
    %33 = arith.addf %30, %32 : vector<64x16xf32>
    %c0_20 = arith.constant 0 : index
    %c0_21 = arith.constant 0 : index
    %34 = vector.load %arg7[%c0_20, %c0_21] : memref<64x1xf32, #tpu.memory_space<vmem>>, vector<64x1xf32>
    %35 = vector.broadcast %34 : vector<64x1xf32> to vector<64x16xf32>
    %36 = arith.addf %33, %35 : vector<64x16xf32>
    %cst_22 = arith.constant 0.000000e+00 : f32
    %37 = vector.broadcast %cst_22 : f32 to vector<64x16xf32>
    %38 = arith.maximumf %36, %37 : vector<64x16xf32>
    %c0_23 = arith.constant 0 : index
    %c0_24 = arith.constant 0 : index
    %39 = vector.load %arg8[%c0_23, %c0_24] : memref<32x64xbf16, #tpu.memory_space<vmem>>, vector<32x64xbf16>
    %40 = arith.truncf %38 : vector<64x16xf32> to vector<64x16xbf16>
    %cst_25 = arith.constant dense<0.000000e+00> : vector<32x16xf32>
    %41 = tpu.matmul %39, %40, %cst_25 {dimension_numbers = #tpu.dot_dimension_numbers<[1], [0], [0], [1], [0, 0, 1, 1], [], []>} : vector<32x64xbf16>, vector<64x16xbf16>, vector<32x16xf32> -> vector<32x16xf32>
    %c0_26 = arith.constant 0 : index
    %c0_27 = arith.constant 0 : index
    %42 = vector.load %arg9[%c0_26, %c0_27] : memref<32x1xf32, #tpu.memory_space<vmem>>, vector<32x1xf32>
    %43 = vector.broadcast %42 : vector<32x1xf32> to vector<32x16xf32>
    %44 = arith.addf %41, %43 : vector<32x16xf32>
    %cst_28 = arith.constant 0.000000e+00 : f32
    %45 = vector.broadcast %cst_28 : f32 to vector<32x16xf32>
    %46 = arith.maximumf %44, %45 : vector<32x16xf32>
    %c0_29 = arith.constant 0 : index
    %c0_30 = arith.constant 0 : index
    %47 = vector.load %arg10[%c0_29, %c0_30] : memref<16x32xbf16, #tpu.memory_space<vmem>>, vector<16x32xbf16>
    %48 = arith.truncf %46 : vector<32x16xf32> to vector<32x16xbf16>
    %cst_31 = arith.constant dense<0.000000e+00> : vector<16x16xf32>
    %49 = tpu.matmul %47, %48, %cst_31 {dimension_numbers = #tpu.dot_dimension_numbers<[1], [0], [0], [1], [0, 0, 1, 1], [], []>} : vector<16x32xbf16>, vector<32x16xbf16>, vector<16x16xf32> -> vector<16x16xf32>
    %c0_32 = arith.constant 0 : index
    %c0_33 = arith.constant 0 : index
    %50 = vector.load %arg11[%c0_32, %c0_33] : memref<16x1xf32, #tpu.memory_space<vmem>>, vector<16x1xf32>
    %51 = vector.broadcast %50 : vector<16x1xf32> to vector<16x16xf32>
    %52 = arith.addf %49, %51 : vector<16x16xf32>
    %cst_34 = arith.constant 0.000000e+00 : f32
    %53 = vector.broadcast %cst_34 : f32 to vector<16x16xf32>
    %54 = arith.maximumf %52, %53 : vector<16x16xf32>
    %c0_35 = arith.constant 0 : index
    %c0_36 = arith.constant 0 : index
    %55 = vector.load %arg12[%c0_35, %c0_36] : memref<32x1xf32, #tpu.memory_space<vmem>>, vector<32x1xf32>
    %56 = vector.broadcast %55 : vector<32x1xf32> to vector<32x16xf32>
    %57 = arith.mulf %24, %56 : vector<32x16xf32>
    %cst_37 = arith.constant dense<0.000000e+00> : vector<16xf32>
    %58 = vector.multi_reduction <add>, %57, %cst_37 [0] : vector<32x16xf32> to vector<16xf32>
    %59 = vector.shape_cast %58 : vector<16xf32> to vector<1x16xf32>
    %c0_38 = arith.constant 0 : index
    %c0_39 = arith.constant 0 : index
    %60 = vector.load %arg13[%c0_38, %c0_39] : memref<16x1xf32, #tpu.memory_space<vmem>>, vector<16x1xf32>
    %61 = vector.broadcast %60 : vector<16x1xf32> to vector<16x16xf32>
    %62 = arith.mulf %54, %61 : vector<16x16xf32>
    %cst_40 = arith.constant dense<0.000000e+00> : vector<16xf32>
    %63 = vector.multi_reduction <add>, %62, %cst_40 [0] : vector<16x16xf32> to vector<16xf32>
    %64 = vector.shape_cast %63 : vector<16xf32> to vector<1x16xf32>
    %65 = arith.addf %59, %64 : vector<1x16xf32>
    %c0_41 = arith.constant 0 : index
    %66 = memref.load %arg14[%c0_41] : memref<1xf32, #tpu.memory_space<smem>>
    %67 = vector.broadcast %66 : f32 to vector<1x16xf32>
    %68 = arith.addf %65, %67 : vector<1x16xf32>
    %69 = arith.negf %68 : vector<1x16xf32>
    %70 = math.exp %69 : vector<1x16xf32>
    %cst_42 = arith.constant 1.000000e+00 : f32
    %71 = vector.broadcast %cst_42 : f32 to vector<1x16xf32>
    %72 = arith.addf %71, %70 : vector<1x16xf32>
    %73 = arith.divf %71, %72 : vector<1x16xf32>
    %c0_43 = arith.constant 0 : index
    %c0_44 = arith.constant 0 : index
    %c0_45 = arith.constant 0 : index
    %74 = vector.load %arg15[%c0_43, %c0_44, %c0_45] : memref<1x1x16xf32, #tpu.memory_space<vmem>>, vector<1x1x16xf32>
    %75 = vector.shape_cast %74 : vector<1x1x16xf32> to vector<1x16xf32>
    %76 = vector.shape_cast %73 : vector<1x16xf32> to vector<1x1x16xf32>
    tpu.vector_store %arg15[%c0_43, %c0_44, %c0_45], %76 {strides = array<i32>} : memref<1x1x16xf32, #tpu.memory_space<vmem>>, vector<1x1x16xf32>,
    return
  }
  func.func @transform_0(%arg0: i32) -> (i32, i32, i32) {
    %c0_i32 = arith.constant 0 : i32
    %c0_i32_0 = arith.constant 0 : i32
    %c0_i32_1 = arith.constant 0 : i32
    return %arg0, %c0_i32, %c0_i32_0 : i32, i32, i32
  }
  func.func @transform_1(%arg0: i32) -> (i32, i32, i32) {
    %c0_i32 = arith.constant 0 : i32
    %c0_i32_0 = arith.constant 0 : i32
    %c0_i32_1 = arith.constant 0 : i32
    return %arg0, %c0_i32, %c0_i32_0 : i32, i32, i32
  }
  func.func @transform_2(%arg0: i32) -> (i32, i32) {
    %c0_i32 = arith.constant 0 : i32
    %c0_i32_0 = arith.constant 0 : i32
    %c0_i32_1 = arith.constant 0 : i32
    return %c0_i32, %c0_i32_0 : i32, i32
  }
  func.func @transform_3(%arg0: i32) -> (i32, i32) {
    %c0_i32 = arith.constant 0 : i32
    %c0_i32_0 = arith.constant 0 : i32
    %c0_i32_1 = arith.constant 0 : i32
    return %c0_i32, %c0_i32_0 : i32, i32
  }
  func.func @transform_4(%arg0: i32) -> (i32, i32) {
    %c0_i32 = arith.constant 0 : i32
    %c0_i32_0 = arith.constant 0 : i32
    %c0_i32_1 = arith.constant 0 : i32
    return %c0_i32, %c0_i32_0 : i32, i32
  }
  func.func @transform_5(%arg0: i32) -> (i32, i32) {
    %c0_i32 = arith.constant 0 : i32
    %c0_i32_0 = arith.constant 0 : i32
    %c0_i32_1 = arith.constant 0 : i32
    return %c0_i32, %c0_i32_0 : i32, i32
  }
  func.func @transform_6(%arg0: i32) -> (i32, i32) {
    %c0_i32 = arith.constant 0 : i32
    %c0_i32_0 = arith.constant 0 : i32
    %c0_i32_1 = arith.constant 0 : i32
    return %c0_i32, %c0_i32_0 : i32, i32
  }
  func.func @transform_7(%arg0: i32) -> (i32, i32) {
    %c0_i32 = arith.constant 0 : i32
    %c0_i32_0 = arith.constant 0 : i32
    %c0_i32_1 = arith.constant 0 : i32
    return %c0_i32, %c0_i32_0 : i32, i32
  }
  func.func @transform_8(%arg0: i32) -> (i32, i32) {
    %c0_i32 = arith.constant 0 : i32
    %c0_i32_0 = arith.constant 0 : i32
    %c0_i32_1 = arith.constant 0 : i32
    return %c0_i32, %c0_i32_0 : i32, i32
  }
  func.func @transform_9(%arg0: i32) -> (i32, i32) {
    %c0_i32 = arith.constant 0 : i32
    %c0_i32_0 = arith.constant 0 : i32
    %c0_i32_1 = arith.constant 0 : i32
    return %c0_i32, %c0_i32_0 : i32, i32
  }
  func.func @transform_10(%arg0: i32) -> (i32, i32) {
    %c0_i32 = arith.constant 0 : i32
    %c0_i32_0 = arith.constant 0 : i32
    %c0_i32_1 = arith.constant 0 : i32
    return %c0_i32, %c0_i32_0 : i32, i32
  }
  func.func @transform_11(%arg0: i32) -> (i32, i32) {
    %c0_i32 = arith.constant 0 : i32
    %c0_i32_0 = arith.constant 0 : i32
    %c0_i32_1 = arith.constant 0 : i32
    return %c0_i32, %c0_i32_0 : i32, i32
  }
  func.func @transform_12(%arg0: i32) -> (i32, i32) {
    %c0_i32 = arith.constant 0 : i32
    %c0_i32_0 = arith.constant 0 : i32
    %c0_i32_1 = arith.constant 0 : i32
    return %c0_i32, %c0_i32_0 : i32, i32
  }
  func.func @transform_13(%arg0: i32) -> i32 {
    %c0_i32 = arith.constant 0 : i32
    %c0_i32_0 = arith.constant 0 : i32
    return %c0_i32 : i32
  }
  func.func @transform_14(%arg0: i32) -> (i32, i32, i32) {
    %c0_i32 = arith.constant 0 : i32
    %c0_i32_0 = arith.constant 0 : i32
    %c0_i32_1 = arith.constant 0 : i32
    return %arg0, %c0_i32, %c0_i32_0 : i32, i32, i32
  }
}

</mosaic_0001>

<llo_original>
// kernel: neural_mf_forward.1
$region0: #{neural_mf_forward.1}
  #allocation0 [shape = 'u32[]', space=smem, size = 0x4, offset = 0x4, fixed_abs, tag = 'smem constant byte address 0x4 - core index']
  #allocation1 [shape = 'u32[144,128]{1,0:T(1,128)}', space=vmem, size = 0x12000, scoped, tag = 'internal scratch']
  #allocation2 [shape = 'f32[1]{0:T(128)S(6)}', space=smem, size = 0x200, scoped, tag = 'scoped memory for neural_mf_forward.1']
  %s0 = inlined_call_operand.vmem [shape: s32[3,1,16], index: 0, kind: input, shape index: {}]
  %s1 = inlined_call_operand.vmem [shape: s32[3,1,16], index: 1, kind: input, shape index: {}]
  %s2 = inlined_call_operand.vmem [shape: bf16[64,16], index: 2, kind: input, shape index: {}]
  %s3 = inlined_call_operand.vmem [shape: bf16[64,16], index: 3, kind: input, shape index: {}]
  %s4 = inlined_call_operand.vmem [shape: bf16[64,32], index: 4, kind: input, shape index: {}]
  %s5 = inlined_call_operand.vmem [shape: bf16[64,32], index: 5, kind: input, shape index: {}]
  %s6 = inlined_call_operand.vmem [shape: f32[64,1], index: 6, kind: input, shape index: {}]
  %s7 = inlined_call_operand.vmem [shape: bf16[32,64], index: 7, kind: input, shape index: {}]
  %s8 = inlined_call_operand.vmem [shape: f32[32,1], index: 8, kind: input, shape index: {}]
  %s9 = inlined_call_operand.vmem [shape: bf16[16,32], index: 9, kind: input, shape index: {}]
  %s10 = inlined_call_operand.vmem [shape: f32[16,1], index: 10, kind: input, shape index: {}]
  %s11 = inlined_call_operand.vmem [shape: f32[32,1], index: 11, kind: input, shape index: {}]
  %s12 = inlined_call_operand.vmem [shape: f32[16,1], index: 12, kind: input, shape index: {}]
  %s13 = inlined_call_operand.<no memory space> [shape: f32[1], index: 13, kind: input, shape index: {}]
  %s14 = inlined_call_operand.vmem [shape: f32[3,1,16], index: 14, kind: output, shape index: {}]
  %s15 = sld [smem:[#allocation0]]
  $region89: #{neural_mf_forward.1} parent=0
    _
  %s17 = ssub.s32 1, %s15
  %s18 = scalar_select 0, %s17, %s15
  %19 = sst [smem:[#allocation2]] %s13
  loop: start=0, step=1, limit=5
  $region2: #{neural_mf_forward.1} parent=0 // loop_pre_header
    _
  $region3: #{neural_mf_forward.1} parent=0 // loop_header
    %s21 = sphi 0, %s25
    %p22 = scmp.ge.s32.totalorder %s21, 5
    %s31 = sphi 0, %s33
    %s34 = sphi 0, %s31
    %s35 = sphi 0, %s34
    %s51 = sphi 0, %s35
    %s57 = sphi 0, %s59
    %s60 = sphi 0, %s57
    %s61 = sphi 0, %s60
    %s77 = sphi 0, %s61
    %s81 = sphi 0, %s81
    %s83 = sphi 0, %s81
    %s84 = sphi 0, %s83
    %s98 = sphi 0, %s84
    %s102 = sphi 0, %s102
    %s104 = sphi 0, %s102
    %s105 = sphi 0, %s104
    %s119 = sphi 0, %s105
    %s123 = sphi 0, %s123
    %s125 = sphi 0, %s123
    %s126 = sphi 0, %s125
    %s140 = sphi 0, %s126
    %s144 = sphi 0, %s144
    %s146 = sphi 0, %s144
    %s147 = sphi 0, %s146
    %s161 = sphi 0, %s147
    %s165 = sphi 0, %s165
    %s167 = sphi 0, %s165
    %s168 = sphi 0, %s167
    %s182 = sphi 0, %s168
    %s186 = sphi 0, %s186
    %s188 = sphi 0, %s186
    %s189 = sphi 0, %s188
    %s203 = sphi 0, %s189
    %s207 = sphi 0, %s207
    %s209 = sphi 0, %s207
    %s210 = sphi 0, %s209
    %s224 = sphi 0, %s210
    %s228 = sphi 0, %s228
    %s230 = sphi 0, %s228
    %s231 = sphi 0, %s230
    %s245 = sphi 0, %s231
    %s249 = sphi 0, %s249
    %s251 = sphi 0, %s249
    %s252 = sphi 0, %s251
    %s266 = sphi 0, %s252
    %s270 = sphi 0, %s270
    %s272 = sphi 0, %s270
    %s273 = sphi 0, %s272
    %s287 = sphi 0, %s273
    %s291 = sphi 0, %s291
    %s293 = sphi 0, %s291
    %s294 = sphi 0, %s293
    %s308 = sphi 0, %s294
    %s312 = sphi 0, %s312
    %s314 = sphi 0, %s312
    %s315 = sphi 0, %s314
    %s329 = sphi 0, %s315
    %s335 = sphi 0, %s337
    %s338 = sphi 0, %s335
    %s339 = sphi 0, %s338
    %s355 = sphi 0, %s339
  $region4: #{neural_mf_forward.1} parent=0 // loop_header_branch
    %24 = sbr.rel (%p22) target = $region8
  $region5: #{neural_mf_forward.1} parent=0 // loop_body
    %s26 = ssub.s32 %s21, 1
    %s27 = ssub.s32 %s21, 2
    %s28 = sadd.s32 %s21, 1
    %s29 = ssub.s32 %s21, %s28
    %p30 = scmp.eq.s32.totalorder %s29, 0
    %s32 = sadd.s32 %s31, 1
    %s33 = scalar_select %p30, %s31, %s32
    %p36 = pneg %p30
    %p37 = scmp.eq.s32.totalorder %s21, 2
    %p38 = por %p36, %p37
    %p39 = scmp.ne.s32.totalorder %s31, %s34
    %p40 = scmp.eq.s32.totalorder %s21, 0
    %p41 = por %p39, %p40
    %p42 = scmp.ne.s32.totalorder %s31, %s34
    %p43 = scmp.eq.s32.totalorder %s26, 2
    %p44 = por %p42, %p43
    %p45 = scmp.ne.s32.totalorder %s34, %s35
    %p46 = scmp.eq.s32.totalorder %s26, 0
    %p47 = por %p45, %p46
    %p48 = scmp.ne.s32.totalorder %s34, %s35
    %p49 = scmp.eq.s32.totalorder %s27, 2
    %p50 = por %p48, %p49
    %p52 = scmp.ne.s32.totalorder %s35, %s51
    %p53 = scmp.eq.s32.totalorder %s27, 0
    %p54 = por %p52, %p53
    %s55 = ssub.s32 %s21, %s28
    %p56 = scmp.eq.s32.totalorder %s55, 0
    %s58 = sadd.s32 %s57, 1
    %s59 = scalar_select %p56, %s57, %s58
    %p62 = pneg %p56
    %p63 = scmp.eq.s32.totalorder %s21, 2
    %p64 = por %p62, %p63
    %p65 = scmp.ne.s32.totalorder %s57, %s60
    %p66 = scmp.eq.s32.totalorder %s21, 0
    %p67 = por %p65, %p66
    %p68 = scmp.ne.s32.totalorder %s57, %s60
    %p69 = scmp.eq.s32.totalorder %s26, 2
    %p70 = por %p68, %p69
    %p71 = scmp.ne.s32.totalorder %s60, %s61
    %p72 = scmp.eq.s32.totalorder %s26, 0
    %p73 = por %p71, %p72
    %p74 = scmp.ne.s32.totalorder %s60, %s61
    %p75 = scmp.eq.s32.totalorder %s27, 2
    %p76 = por %p74, %p75
    %p78 = scmp.ne.s32.totalorder %s61, %s77
    %p79 = scmp.eq.s32.totalorder %s27, 0
    %p80 = por %p78, %p79
    %s82 = sadd.s32 %s81, 1
    %p85 = scmp.eq.s32.totalorder %s21, 2
    %p86 = scmp.ne.s32.totalorder %s81, %s83
    %p87 = scmp.eq.s32.totalorder %s21, 0
    %p88 = por %p86, %p87
    %p89 = scmp.ne.s32.totalorder %s81, %s83
    %p90 = scmp.eq.s32.totalorder %s26, 2
    %p91 = por %p89, %p90
    %p92 = scmp.ne.s32.totalorder %s83, %s84
    %p93 = scmp.eq.s32.totalorder %s26, 0
    %p94 = por %p92, %p93
    %p95 = scmp.ne.s32.totalorder %s83, %s84
    %p96 = scmp.eq.s32.totalorder %s27, 2
    %p97 = por %p95, %p96
    %p99 = scmp.ne.s32.totalorder %s84, %s98
    %p100 = scmp.eq.s32.totalorder %s27, 0
    %p101 = por %p99, %p100
    %s103 = sadd.s32 %s102, 1
    %p106 = scmp.eq.s32.totalorder %s21, 2
    %p107 = scmp.ne.s32.totalorder %s102, %s104
    %p108 = scmp.eq.s32.totalorder %s21, 0
    %p109 = por %p107, %p108
    %p110 = scmp.ne.s32.totalorder %s102, %s104
    %p111 = scmp.eq.s32.totalorder %s26, 2
    %p112 = por %p110, %p111
    %p113 = scmp.ne.s32.totalorder %s104, %s105
    %p114 = scmp.eq.s32.totalorder %s26, 0
    %p115 = por %p113, %p114
    %p116 = scmp.ne.s32.totalorder %s104, %s105
    %p117 = scmp.eq.s32.totalorder %s27, 2
    %p118 = por %p116, %p117
    %p120 = scmp.ne.s32.totalorder %s105, %s119
    %p121 = scmp.eq.s32.totalorder %s27, 0
    %p122 = por %p120, %p121
    %s124 = sadd.s32 %s123, 1
    %p127 = scmp.eq.s32.totalorder %s21, 2
    %p128 = scmp.ne.s32.totalorder %s123, %s125
    %p129 = scmp.eq.s32.totalorder %s21, 0
    %p130 = por %p128, %p129
    %p131 = scmp.ne.s32.totalorder %s123, %s125
    %p132 = scmp.eq.s32.totalorder %s26, 2
    %p133 = por %p131, %p132
    %p134 = scmp.ne.s32.totalorder %s125, %s126
    %p135 = scmp.eq.s32.totalorder %s26, 0
    %p136 = por %p134, %p135
    %p137 = scmp.ne.s32.totalorder %s125, %s126
    %p138 = scmp.eq.s32.totalorder %s27, 2
    %p139 = por %p137, %p138
    %p141 = scmp.ne.s32.totalorder %s126, %s140
    %p142 = scmp.eq.s32.totalorder %s27, 0
    %p143 = por %p141, %p142
    %s145 = sadd.s32 %s144, 1
    %p148 = scmp.eq.s32.totalorder %s21, 2
    %p149 = scmp.ne.s32.totalorder %s144, %s146
    %p150 = scmp.eq.s32.totalorder %s21, 0
    %p151 = por %p149, %p150
    %p152 = scmp.ne.s32.totalorder %s144, %s146
    %p153 = scmp.eq.s32.totalorder %s26, 2
    %p154 = por %p152, %p153
    %p155 = scmp.ne.s32.totalorder %s146, %s147
    %p156 = scmp.eq.s32.totalorder %s26, 0
    %p157 = por %p155, %p156
    %p158 = scmp.ne.s32.totalorder %s146, %s147
    %p159 = scmp.eq.s32.totalorder %s27, 2
    %p160 = por %p158, %p159
    %p162 = scmp.ne.s32.totalorder %s147, %s161
    %p163 = scmp.eq.s32.totalorder %s27, 0
    %p164 = por %p162, %p163
    %s166 = sadd.s32 %s165, 1
    %p169 = scmp.eq.s32.totalorder %s21, 2
    %p170 = scmp.ne.s32.totalorder %s165, %s167
    %p171 = scmp.eq.s32.totalorder %s21, 0
    %p172 = por %p170, %p171
    %p173 = scmp.ne.s32.totalorder %s165, %s167
    %p174 = scmp.eq.s32.totalorder %s26, 2
    %p175 = por %p173, %p174
    %p176 = scmp.ne.s32.totalorder %s167, %s168
    %p177 = scmp.eq.s32.totalorder %s26, 0
    %p178 = por %p176, %p177
    %p179 = scmp.ne.s32.totalorder %s167, %s168
    %p180 = scmp.eq.s32.totalorder %s27, 2
    %p181 = por %p179, %p180
    %p183 = scmp.ne.s32.totalorder %s168, %s182
    %p184 = scmp.eq.s32.totalorder %s27, 0
    %p185 = por %p183, %p184
    %s187 = sadd.s32 %s186, 1
    %p190 = scmp.eq.s32.totalorder %s21, 2
    %p191 = scmp.ne.s32.totalorder %s186, %s188
    %p192 = scmp.eq.s32.totalorder %s21, 0
    %p193 = por %p191, %p192
    %p194 = scmp.ne.s32.totalorder %s186, %s188
    %p195 = scmp.eq.s32.totalorder %s26, 2
    %p196 = por %p194, %p195
    %p197 = scmp.ne.s32.totalorder %s188, %s189
    %p198 = scmp.eq.s32.totalorder %s26, 0
    %p199 = por %p197, %p198
    %p200 = scmp.ne.s32.totalorder %s188, %s189
    %p201 = scmp.eq.s32.totalorder %s27, 2
    %p202 = por %p200, %p201
    %p204 = scmp.ne.s32.totalorder %s189, %s203
    %p205 = scmp.eq.s32.totalorder %s27, 0
    %p206 = por %p204, %p205
    %s208 = sadd.s32 %s207, 1
    %p211 = scmp.eq.s32.totalorder %s21, 2
    %p212 = scmp.ne.s32.totalorder %s207, %s209
    %p213 = scmp.eq.s32.totalorder %s21, 0
    %p214 = por %p212, %p213
    %p215 = scmp.ne.s32.totalorder %s207, %s209
    %p216 = scmp.eq.s32.totalorder %s26, 2
    %p217 = por %p215, %p216
    %p218 = scmp.ne.s32.totalorder %s209, %s210
    %p219 = scmp.eq.s32.totalorder %s26, 0
    %p220 = por %p218, %p219
    %p221 = scmp.ne.s32.totalorder %s209, %s210
    %p222 = scmp.eq.s32.totalorder %s27, 2
    %p223 = por %p221, %p222
    %p225 = scmp.ne.s32.totalorder %s210, %s224
    %p226 = scmp.eq.s32.totalorder %s27, 0
    %p227 = por %p225, %p226
    %s229 = sadd.s32 %s228, 1
    %p232 = scmp.eq.s32.totalorder %s21, 2
    %p233 = scmp.ne.s32.totalorder %s228, %s230
    %p234 = scmp.eq.s32.totalorder %s21, 0
    %p235 = por %p233, %p234
    %p236 = scmp.ne.s32.totalorder %s228, %s230
    %p237 = scmp.eq.s32.totalorder %s26, 2
    %p238 = por %p236, %p237
    %p239 = scmp.ne.s32.totalorder %s230, %s231
    %p240 = scmp.eq.s32.totalorder %s26, 0
    %p241 = por %p239, %p240
    %p242 = scmp.ne.s32.totalorder %s230, %s231
    %p243 = scmp.eq.s32.totalorder %s27, 2
    %p244 = por %p242, %p243
    %p246 = scmp.ne.s32.totalorder %s231, %s245
    %p247 = scmp.eq.s32.totalorder %s27, 0
    %p248 = por %p246, %p247
    %s250 = sadd.s32 %s249, 1
    %p253 = scmp.eq.s32.totalorder %s21, 2
    %p254 = scmp.ne.s32.totalorder %s249, %s251
    %p255 = scmp.eq.s32.totalorder %s21, 0
    %p256 = por %p254, %p255
    %p257 = scmp.ne.s32.totalorder %s249, %s251
    %p258 = scmp.eq.s32.totalorder %s26, 2
    %p259 = por %p257, %p258
    %p260 = scmp.ne.s32.totalorder %s251, %s252
    %p261 = scmp.eq.s32.totalorder %s26, 0
    %p262 = por %p260, %p261
    %p263 = scmp.ne.s32.totalorder %s251, %s252
    %p264 = scmp.eq.s32.totalorder %s27, 2
    %p265 = por %p263, %p264
    %p267 = scmp.ne.s32.totalorder %s252, %s266
    %p268 = scmp.eq.s32.totalorder %s27, 0
    %p269 = por %p267, %p268
    %s271 = sadd.s32 %s270, 1
    %p274 = scmp.eq.s32.totalorder %s21, 2
    %p275 = scmp.ne.s32.totalorder %s270, %s272
    %p276 = scmp.eq.s32.totalorder %s21, 0
    %p277 = por %p275, %p276
    %p278 = scmp.ne.s32.totalorder %s270, %s272
    %p279 = scmp.eq.s32.totalorder %s26, 2
    %p280 = por %p278, %p279
    %p281 = scmp.ne.s32.totalorder %s272, %s273
    %p282 = scmp.eq.s32.totalorder %s26, 0
    %p283 = por %p281, %p282
    %p284 = scmp.ne.s32.totalorder %s272, %s273
    %p285 = scmp.eq.s32.totalorder %s27, 2
    %p286 = por %p284, %p285
    %p288 = scmp.ne.s32.totalorder %s273, %s287
    %p289 = scmp.eq.s32.totalorder %s27, 0
    %p290 = por %p288, %p289
    %s292 = sadd.s32 %s291, 1
    %p295 = scmp.eq.s32.totalorder %s21, 2
    %p296 = scmp.ne.s32.totalorder %s291, %s293
    %p297 = scmp.eq.s32.totalorder %s21, 0
    %p298 = por %p296, %p297
    %p299 = scmp.ne.s32.totalorder %s291, %s293
    %p300 = scmp.eq.s32.totalorder %s26, 2
    %p301 = por %p299, %p300
    %p302 = scmp.ne.s32.totalorder %s293, %s294
    %p303 = scmp.eq.s32.totalorder %s26, 0
    %p304 = por %p302, %p303
    %p305 = scmp.ne.s32.totalorder %s293, %s294
    %p306 = scmp.eq.s32.totalorder %s27, 2
    %p307 = por %p305, %p306
    %p309 = scmp.ne.s32.totalorder %s294, %s308
    %p310 = scmp.eq.s32.totalorder %s27, 0
    %p311 = por %p309, %p310
    %s313 = sadd.s32 %s312, 1
    %p316 = scmp.eq.s32.totalorder %s21, 2
    %p317 = scmp.ne.s32.totalorder %s312, %s314
    %p318 = scmp.eq.s32.totalorder %s21, 0
    %p319 = por %p317, %p318
    %p320 = scmp.ne.s32.totalorder %s312, %s314
    %p321 = scmp.eq.s32.totalorder %s26, 2
    %p322 = por %p320, %p321
    %p323 = scmp.ne.s32.totalorder %s314, %s315
    %p324 = scmp.eq.s32.totalorder %s26, 0
    %p325 = por %p323, %p324
    %p326 = scmp.ne.s32.totalorder %s314, %s315
    %p327 = scmp.eq.s32.totalorder %s27, 2
    %p328 = por %p326, %p327
    %p330 = scmp.ne.s32.totalorder %s315, %s329
    %p331 = scmp.eq.s32.totalorder %s27, 0
    %p332 = por %p330, %p331
    %s333 = ssub.s32 %s21, %s28
    %p334 = scmp.eq.s32.totalorder %s333, 0
    %s336 = sadd.s32 %s335, 1
    %s337 = scalar_select %p334, %s335, %s336
    %p340 = pneg %p334
    %p341 = scmp.eq.s32.totalorder %s21, 2
    %p342 = por %p340, %p341
    %p343 = scmp.ne.s32.totalorder %s335, %s338
    %p344 = scmp.eq.s32.totalorder %s21, 0
    %p345 = por %p343, %p344
    %p346 = scmp.ne.s32.totalorder %s335, %s338
    %p347 = scmp.eq.s32.totalorder %s26, 2
    %p348 = por %p346, %p347
    %p349 = scmp.ne.s32.totalorder %s338, %s339
    %p350 = scmp.eq.s32.totalorder %s26, 0
    %p351 = por %p349, %p350
    %p352 = scmp.ne.s32.totalorder %s338, %s339
    %p353 = scmp.eq.s32.totalorder %s27, 2
    %p354 = por %p352, %p353
    %p356 = scmp.ne.s32.totalorder %s339, %s355
    %p357 = scmp.eq.s32.totalorder %s27, 0
    %p358 = por %p356, %p357
    %p359 = scmp.le.s32.totalorder 1, %s21
    %p360 = scmp.lt.s32.totalorder %s21, 4
    %p361 = pnand %p359, %p360
    %p362 = pneg %p361
    // Predicated region
    $region9: #{neural_mf_forward.1} parent=5 // pred_check
      _
    $region10: #{neural_mf_forward.1} parent=5 // pred_check_branch
      %364 = sbr.rel (%p361) target = $region12
    $region11: #{neural_mf_forward.1} parent=5 // pred_region
      %s365 = ssub.s32 %s21, 1
      // Predicated region
      $region13: #{neural_mf_forward.1} parent=11 // pred_check
        %p366 = pneg %p94
      $region14: #{neural_mf_forward.1} parent=11 // pred_check_branch
        %368 = sbr.rel (%p366) target = $region16
      $region15: #{neural_mf_forward.1} parent=11 // pred_region
        _
      $region16: #{neural_mf_forward.1} parent=11 // pred_fallthru
        _
      // Predicated region
      $region17: #{neural_mf_forward.1} parent=11 // pred_check
        %p369 = pneg %p115
      $region18: #{neural_mf_forward.1} parent=11 // pred_check_branch
        %371 = sbr.rel (%p369) target = $region20
      $region19: #{neural_mf_forward.1} parent=11 // pred_region
        _
      $region20: #{neural_mf_forward.1} parent=11 // pred_fallthru
        _
      // Predicated region
      $region21: #{neural_mf_forward.1} parent=11 // pred_check
        %p372 = pneg %p136
      $region22: #{neural_mf_forward.1} parent=11 // pred_check_branch
        %374 = sbr.rel (%p372) target = $region24
      $region23: #{neural_mf_forward.1} parent=11 // pred_region
        _
      $region24: #{neural_mf_forward.1} parent=11 // pred_fallthru
        _
      // Predicated region
      $region25: #{neural_mf_forward.1} parent=11 // pred_check
        %p375 = pneg %p157
      $region26: #{neural_mf_forward.1} parent=11 // pred_check_branch
        %377 = sbr.rel (%p375) target = $region28
      $region27: #{neural_mf_forward.1} parent=11 // pred_region
        _
      $region28: #{neural_mf_forward.1} parent=11 // pred_fallthru
        _
      // Predicated region
      $region29: #{neural_mf_forward.1} parent=11 // pred_check
        %p378 = pneg %p178
      $region30: #{neural_mf_forward.1} parent=11 // pred_check_branch
        %380 = sbr.rel (%p378) target = $region32
      $region31: #{neural_mf_forward.1} parent=11 // pred_region
        _
      $region32: #{neural_mf_forward.1} parent=11 // pred_fallthru
        _
      // Predicated region
      $region33: #{neural_mf_forward.1} parent=11 // pred_check
        %p381 = pneg %p199
      $region34: #{neural_mf_forward.1} parent=11 // pred_check_branch
        %383 = sbr.rel (%p381) target = $region36
      $region35: #{neural_mf_forward.1} parent=11 // pred_region
        _
      $region36: #{neural_mf_forward.1} parent=11 // pred_fallthru
        _
      // Predicated region
      $region37: #{neural_mf_forward.1} parent=11 // pred_check
        %p384 = pneg %p220
      $region38: #{neural_mf_forward.1} parent=11 // pred_check_branch
        %386 = sbr.rel (%p384) target = $region40
      $region39: #{neural_mf_forward.1} parent=11 // pred_region
        _
      $region40: #{neural_mf_forward.1} parent=11 // pred_fallthru
        _
      // Predicated region
      $region41: #{neural_mf_forward.1} parent=11 // pred_check
        %p387 = pneg %p241
      $region42: #{neural_mf_forward.1} parent=11 // pred_check_branch
        %389 = sbr.rel (%p387) target = $region44
      $region43: #{neural_mf_forward.1} parent=11 // pred_region
        _
      $region44: #{neural_mf_forward.1} parent=11 // pred_fallthru
        _
      // Predicated region
      $region45: #{neural_mf_forward.1} parent=11 // pred_check
        %p390 = pneg %p262
      $region46: #{neural_mf_forward.1} parent=11 // pred_check_branch
        %392 = sbr.rel (%p390) target = $region48
      $region47: #{neural_mf_forward.1} parent=11 // pred_region
        _
      $region48: #{neural_mf_forward.1} parent=11 // pred_fallthru
        _
      // Predicated region
      $region49: #{neural_mf_forward.1} parent=11 // pred_check
        %p393 = pneg %p283
      $region50: #{neural_mf_forward.1} parent=11 // pred_check_branch
        %395 = sbr.rel (%p393) target = $region52
      $region51: #{neural_mf_forward.1} parent=11 // pred_region
        _
      $region52: #{neural_mf_forward.1} parent=11 // pred_fallthru
        _
      // Predicated region
      $region53: #{neural_mf_forward.1} parent=11 // pred_check
        %p396 = pneg %p304
      $region54: #{neural_mf_forward.1} parent=11 // pred_check_branch
        %398 = sbr.rel (%p396) target = $region56
      $region55: #{neural_mf_forward.1} parent=11 // pred_region
        _
      $region56: #{neural_mf_forward.1} parent=11 // pred_fallthru
        _
      // Predicated region
      $region57: #{neural_mf_forward.1} parent=11 // pred_check
        %p399 = pneg %p325
      $region58: #{neural_mf_forward.1} parent=11 // pred_check_branch
        %401 = sbr.rel (%p399) target = $region60
      $region59: #{neural_mf_forward.1} parent=11 // pred_region
        _
      $region60: #{neural_mf_forward.1} parent=11 // pred_fallthru
        _
    $region12: #{neural_mf_forward.1} parent=5 // pred_fallthru
      _
    %p402 = scmp.lt.s32.totalorder %s21, 3
    // Predicated region
    $region61: #{neural_mf_forward.1} parent=5 // pred_check
      %p403 = pneg %p402
    $region62: #{neural_mf_forward.1} parent=5 // pred_check_branch
      %405 = sbr.rel (%p403) target = $region64
    $region63: #{neural_mf_forward.1} parent=5 // pred_region
      // Predicated region
      $region65: #{neural_mf_forward.1} parent=63 // pred_check
        %p406 = pneg %p41
      $region66: #{neural_mf_forward.1} parent=63 // pred_check_branch
        %408 = sbr.rel (%p406) target = $region68
      $region67: #{neural_mf_forward.1} parent=63 // pred_region
        %p409 = scmp.lt.s32.totalorder %s21, 2
        %s410 = scalar_select %p409, %s21, 2
        %s411 = scalar_lea.vmem %s0, %s410
      $region68: #{neural_mf_forward.1} parent=63 // pred_fallthru
        _
      // Predicated region
      $region69: #{neural_mf_forward.1} parent=63 // pred_check
        %p412 = pneg %p67
      $region70: #{neural_mf_forward.1} parent=63 // pred_check_branch
        %414 = sbr.rel (%p412) target = $region72
      $region71: #{neural_mf_forward.1} parent=63 // pred_region
        %p415 = scmp.lt.s32.totalorder %s21, 2
        %s416 = scalar_select %p415, %s21, 2
        %s417 = scalar_lea.vmem %s1, %s416
      $region72: #{neural_mf_forward.1} parent=63 // pred_fallthru
        _
    $region64: #{neural_mf_forward.1} parent=5 // pred_fallthru
      _
    %p418 = scmp.le.s32.totalorder 1, %s21
    %p419 = scmp.lt.s32.totalorder %s21, 4
    %p420 = pnand %p418, %p419
    %p421 = pneg %p420
    // Predicated region
    $region73: #{neural_mf_forward.1} parent=5 // pred_check
      _
    $region74: #{neural_mf_forward.1} parent=5 // pred_check_branch
      %423 = sbr.rel (%p420) target = $region76
    $region75: #{neural_mf_forward.1} parent=5 // pred_region
      %s424 = ssub.s32 %s21, 1
      %p425 = scmp.lt.s32.totalorder %s26, 2
      %s426 = scalar_select %p425, %s26, 2
      %s427 = scalar_lea.vmem %s0, %s426
      %p428 = pneg %p47
      %p429 = pneg %p44
      %p430 = scmp.lt.s32.totalorder %s26, 2
      %s431 = scalar_select %p430, %s26, 2
      %s432 = scalar_lea.vmem %s1, %s431
      %p433 = pneg %p73
      %p434 = pneg %p70
      %p435 = pneg %p94
      %p436 = pneg %p91
      %p437 = pneg %p115
      %p438 = pneg %p112
      %p439 = pneg %p136
      %p440 = pneg %p133
      %p441 = pneg %p157
      %p442 = pneg %p154
      %p443 = pneg %p178
      %p444 = pneg %p175
      %p445 = pneg %p199
      %p446 = pneg %p196
      %p447 = pneg %p220
      %p448 = pneg %p217
      %p449 = pneg %p241
      %p450 = pneg %p238
      %p451 = pneg %p262
      %p452 = pneg %p259
      %p453 = pneg %p283
      %p454 = pneg %p280
      %p455 = pneg %p304
      %p456 = pneg %p301
      %p457 = pneg %p325
      %p458 = pneg %p322
      %p459 = pneg %p351
      %p460 = pneg %p348
      %p461 = scmp.lt.s32.totalorder %s26, 2
      %s462 = scalar_select %p461, %s26, 2
      %s463 = scalar_lea.vmem %s14, %s462
      %p464 = scmp.lt.s32.totalorder %s26, 2
      %s465 = scalar_select %p464, %s26, 2
      %s466 = scalar_lea.vmem %s0, %s465
      %p467 = scmp.lt.s32.totalorder %s26, 2
      %s468 = scalar_select %p467, %s26, 2
      %s469 = scalar_lea.vmem %s1, %s468
      %p470 = scmp.lt.s32.totalorder %s26, 2
      %s471 = scalar_select %p470, %s26, 2
      %s472 = scalar_lea.vmem %s14, %s471
      %v474 = vld [vmem:[%s466] sm:$0x1]
      %v475 = vld [vmem:[%s469] sm:$0x1]
      %v476 = vlaneseq
      %v477 = vshrl.u32 %v476, 7
      %v478 = vadd.s32 %v477, 8
      %v479 = vlaneseq
      %v480 = vshrl.u32 %v479, 7
      %v481 = vsub.s32 0, %v480
      %v482 = vrot.slane %v474, %v481
      %vm483 = vcmp.eq.s32.totalorder %v477, %v482
      %vm484 = vcmp.eq.s32.totalorder %v478, %v482
      %v485 = vsel %vm483, 1.0, 0.0
      %v486 = vsel %vm484, 1.0, 0.0
      %v487 = vpack.c.bf16 %v486, %v485
      %v488 = vlaneseq
      %v489 = vshrl.u32 %v488, 7
      %v490 = vsub.s32 0, %v489
      %v491 = vrot.slane %v475, %v490
      %vm492 = vcmp.eq.s32.totalorder %v477, %v491
      %vm493 = vcmp.eq.s32.totalorder %v478, %v491
      %v494 = vsel %vm492, 1.0, 0.0
      %v495 = vsel %vm493, 1.0, 0.0
      %v496 = vpack.c.bf16 %v495, %v494
      %v497 = vld [vmem:[%s2] sm:$0xf]
      %v498 = vld [vmem:[%s2 + $0x4] sm:$0xf]
      %v499 = vld [vmem:[%s2 + $0x8] sm:$0xf]
      %v500 = vld [vmem:[%s2 + $0xc] sm:$0xf]
      %v501 = vld [vmem:[%s2 + $0x10] sm:$0xf]
      %v502 = vld [vmem:[%s2 + $0x14] sm:$0xf]
      %v503 = vld [vmem:[%s2 + $0x18] sm:$0xf]
      %v504 = vld [vmem:[%s2 + $0x1c] sm:$0xf]
      %v513 = vunpack.c.l.b16 %v497
      %v514 = vunpack.c.l.b16 %v498
      %v515 = vunpack.c.l.b16 %v499
      %v516 = vunpack.c.l.b16 %v500
      %v517 = vunpack.c.l.b16 %v501
      %v518 = vunpack.c.l.b16 %v502
      %v519 = vunpack.c.l.b16 %v503
      %v520 = vunpack.c.l.b16 %v504
      %v521 = vpack.c.b16 %v514, %v513
      %v522 = vpack.c.b16 %v516, %v515
      %v523 = vpack.c.b16 %v518, %v517
      %v524 = vpack.c.b16 %v520, %v519
      %vm525 = vcmask 130048
      %v527 = vsel %vm525, %v521, 0
      %v530 = vsel %vm525, %v522, 0
      %v533 = vsel %vm525, %v523, 0
      %v536 = vsel %vm525, %v524, 0
      %538 = vmatprep.subr.bf16.mxu0 0
      %539 = vmatpush1.bf16.msra.mxu0 %v487
      %540 = vmatprep.subr.bf16.mxu0 0
      %541 = vmatpush1.bf16.msra.mxu0 0
      %542 = vmatprep.subr.bf16.mxu0 0
      %543 = vmatpush1.bf16.msra.mxu0 0
      %544 = vmatprep.subr.bf16.mxu0 0
      %545 = vmatpush1.bf16.msra.mxu0 0
      %546 = vmatprep.subr.bf16.mxu0 0
      %547 = vmatpush1.bf16.msra.mxu0 0
      %548 = vmatprep.subr.bf16.mxu0 0
      %549 = vmatpush1.bf16.msra.mxu0 0
      %550 = vmatprep.subr.bf16.mxu0 0
      %551 = vmatpush1.bf16.msra.mxu0 0
      %552 = vmatprep.subr.bf16.mxu0 0
      %553 = vmatpush1.bf16.msra.mxu0 0
      %554 = vmatprep.subr.bf16.mxu0 0
      %555 = vmatpush1.bf16.msra.mxu0 0
      %556 = vmatprep.subr.bf16.mxu0 0
      %557 = vmatpush1.bf16.msra.mxu0 0
      %558 = vmatprep.subr.bf16.mxu0 0
      %559 = vmatpush1.bf16.msra.mxu0 0
      %560 = vmatprep.subr.bf16.mxu0 0
      %561 = vmatpush1.bf16.msra.mxu0 0
      %562 = vmatprep.subr.bf16.mxu0 0
      %563 = vmatpush1.bf16.msra.mxu0 0
      %564 = vmatprep.subr.bf16.mxu0 0
      %565 = vmatpush1.bf16.msra.mxu0 0
      %566 = vmatprep.subr.bf16.mxu0 0
      %567 = vmatpush1.bf16.msra.mxu0 0
      %568 = vmatprep.subr.bf16.mxu0 0
      %569 = vmatpush1.bf16.msra.mxu0 0
      %570 = vmatprep.mubr.bf16.mxu0 0
      %571 = vmatmul.mubr.bf16.gmra.mrb[0].mxu0 %v527
      %v572 = vpop.f32.mrb[0].mxu0
      %v573 = vadd.f32 0.0, %v572
      %v574 = vpop.f32.mrb[0].mxu0
      %v575 = vpop.f32.mrb[0].mxu0
      %v576 = vadd.f32 0.0, %v575
      %v577 = vpop.f32.mrb[0].mxu0
      %578 = vmatprep.mubr.bf16.mxu0 0
      %579 = vmatmul.mubr.bf16.gmra.mrb[0].mxu0 %v530
      %v580 = vpop.f32.mrb[0].mxu0
      %v581 = vadd.f32 0.0, %v580
      %v582 = vpop.f32.mrb[0].mxu0
      %v583 = vpop.f32.mrb[0].mxu0
      %v584 = vadd.f32 0.0, %v583
      %v585 = vpop.f32.mrb[0].mxu0
      %586 = vmatprep.mubr.bf16.mxu0 0
      %587 = vmatmul.mubr.bf16.gmra.mrb[0].mxu0 %v533
      %v588 = vpop.f32.mrb[0].mxu0
      %v589 = vadd.f32 0.0, %v588
      %v590 = vpop.f32.mrb[0].mxu0
      %v591 = vpop.f32.mrb[0].mxu0
      %v592 = vadd.f32 0.0, %v591
      %v593 = vpop.f32.mrb[0].mxu0
      %594 = vmatprep.mubr.bf16.mxu0 0
      %595 = vmatmul.mubr.bf16.gmra.mrb[0].mxu0 %v536
      %v596 = vpop.f32.mrb[0].mxu0
      %v597 = vadd.f32 0.0, %v596
      %v598 = vpop.f32.mrb[0].mxu0
      %v599 = vpop.f32.mrb[0].mxu0
      %v600 = vadd.f32 0.0, %v599
      %v601 = vpop.f32.mrb[0].mxu0
      %602 = vdwg.mxu0
      %v603 = vld [vmem:[%s3] sm:$0xf]
      %v604 = vld [vmem:[%s3 + $0x4] sm:$0xf]
      %v605 = vld [vmem:[%s3 + $0x8] sm:$0xf]
      %v606 = vld [vmem:[%s3 + $0xc] sm:$0xf]
      %v607 = vld [vmem:[%s3 + $0x10] sm:$0xf]
      %v608 = vld [vmem:[%s3 + $0x14] sm:$0xf]
      %v609 = vld [vmem:[%s3 + $0x18] sm:$0xf]
      %v610 = vld [vmem:[%s3 + $0x1c] sm:$0xf]
      %v619 = vunpack.c.l.b16 %v603
      %v620 = vunpack.c.l.b16 %v604
      %v621 = vunpack.c.l.b16 %v605
      %v622 = vunpack.c.l.b16 %v606
      %v623 = vunpack.c.l.b16 %v607
      %v624 = vunpack.c.l.b16 %v608
      %v625 = vunpack.c.l.b16 %v609
      %v626 = vunpack.c.l.b16 %v610
      %v627 = vpack.c.b16 %v620, %v619
      %v628 = vpack.c.b16 %v622, %v621
      %v629 = vpack.c.b16 %v624, %v623
      %v630 = vpack.c.b16 %v626, %v625
      %v632 = vsel %vm525, %v627, 0
      %v635 = vsel %vm525, %v628, 0
      %v638 = vsel %vm525, %v629, 0
      %v641 = vsel %vm525, %v630, 0
      %643 = vmatprep.subr.bf16.mxu0 0
      %644 = vmatpush1.bf16.msra.mxu0 %v496
      %645 = vmatprep.subr.bf16.mxu0 0
      %646 = vmatpush1.bf16.msra.mxu0 0
      %647 = vmatprep.subr.bf16.mxu0 0
      %648 = vmatpush1.bf16.msra.mxu0 0
      %649 = vmatprep.subr.bf16.mxu0 0
      %650 = vmatpush1.bf16.msra.mxu0 0
      %651 = vmatprep.subr.bf16.mxu0 0
      %652 = vmatpush1.bf16.msra.mxu0 0
      %653 = vmatprep.subr.bf16.mxu0 0
      %654 = vmatpush1.bf16.msra.mxu0 0
      %655 = vmatprep.subr.bf16.mxu0 0
      %656 = vmatpush1.bf16.msra.mxu0 0
      %657 = vmatprep.subr.bf16.mxu0 0
      %658 = vmatpush1.bf16.msra.mxu0 0
      %659 = vmatprep.subr.bf16.mxu0 0
      %660 = vmatpush1.bf16.msra.mxu0 0
      %661 = vmatprep.subr.bf16.mxu0 0
      %662 = vmatpush1.bf16.msra.mxu0 0
      %663 = vmatprep.subr.bf16.mxu0 0
      %664 = vmatpush1.bf16.msra.mxu0 0
      %665 = vmatprep.subr.bf16.mxu0 0
      %666 = vmatpush1.bf16.msra.mxu0 0
      %667 = vmatprep.subr.bf16.mxu0 0
      %668 = vmatpush1.bf16.msra.mxu0 0
      %669 = vmatprep.subr.bf16.mxu0 0
      %670 = vmatpush1.bf16.msra.mxu0 0
      %671 = vmatprep.subr.bf16.mxu0 0
      %672 = vmatpush1.bf16.msra.mxu0 0
      %673 = vmatprep.subr.bf16.mxu0 0
      %674 = vmatpush1.bf16.msra.mxu0 0
      %675 = vmatprep.mubr.bf16.mxu0 0
      %676 = vmatmul.mubr.bf16.gmra.mrb[0].mxu0 %v632
      %v677 = vpop.f32.mrb[0].mxu0
      %v678 = vadd.f32 0.0, %v677
      %v679 = vpop.f32.mrb[0].mxu0
      %v680 = vpop.f32.mrb[0].mxu0
      %v681 = vadd.f32 0.0, %v680
      %v682 = vpop.f32.mrb[0].mxu0
      %683 = vmatprep.mubr.bf16.mxu0 0
      %684 = vmatmul.mubr.bf16.gmra.mrb[0].mxu0 %v635
      %v685 = vpop.f32.mrb[0].mxu0
      %v686 = vadd.f32 0.0, %v685
      %v687 = vpop.f32.mrb[0].mxu0
      %v688 = vpop.f32.mrb[0].mxu0
      %v689 = vadd.f32 0.0, %v688
      %v690 = vpop.f32.mrb[0].mxu0
      %691 = vmatprep.mubr.bf16.mxu0 0
      %692 = vmatmul.mubr.bf16.gmra.mrb[0].mxu0 %v638
      %v693 = vpop.f32.mrb[0].mxu0
      %v694 = vadd.f32 0.0, %v693
      %v695 = vpop.f32.mrb[0].mxu0
      %v696 = vpop.f32.mrb[0].mxu0
      %v697 = vadd.f32 0.0, %v696
      %v698 = vpop.f32.mrb[0].mxu0
      %699 = vmatprep.mubr.bf16.mxu0 0
      %700 = vmatmul.mubr.bf16.gmra.mrb[0].mxu0 %v641
      %v701 = vpop.f32.mrb[0].mxu0
      %v702 = vadd.f32 0.0, %v701
      %v703 = vpop.f32.mrb[0].mxu0
      %v704 = vpop.f32.mrb[0].mxu0
      %v705 = vadd.f32 0.0, %v704
      %v706 = vpop.f32.mrb[0].mxu0
      %707 = vdwg.mxu0
      %v708 = vmul.f32 %v589, %v694
      %v709 = vmul.f32 %v592, %v697
      %v710 = vmul.f32 %v597, %v702
      %v711 = vmul.f32 %v600, %v705
      %v712 = vpack.c.bf16 %v576, %v573
      %v713 = vpack.c.bf16 %v584, %v581
      %v714 = vpack.c.bf16 %v681, %v678
      %v715 = vpack.c.bf16 %v689, %v686
      %v716 = vld [vmem:[%s4] sm:$0xf]
      %v717 = vld [vmem:[%s4 + $0x4] sm:$0xf]
      %v718 = vld [vmem:[%s4 + $0x8] sm:$0xf]
      %v719 = vld [vmem:[%s4 + $0xc] sm:$0xf]
      %v720 = vld [vmem:[%s4 + $0x10] sm:$0xf]
      %v721 = vld [vmem:[%s4 + $0x14] sm:$0xf]
      %v722 = vld [vmem:[%s4 + $0x18] sm:$0xf]
      %v723 = vld [vmem:[%s4 + $0x1c] sm:$0xf]
      %v724 = vld [vmem:[%s5] sm:$0xf]
      %v725 = vld [vmem:[%s5 + $0x4] sm:$0xf]
      %v726 = vld [vmem:[%s5 + $0x8] sm:$0xf]
      %v727 = vld [vmem:[%s5 + $0xc] sm:$0xf]
      %v728 = vld [vmem:[%s5 + $0x10] sm:$0xf]
      %v729 = vld [vmem:[%s5 + $0x14] sm:$0xf]
      %v730 = vld [vmem:[%s5 + $0x18] sm:$0xf]
      %v731 = vld [vmem:[%s5 + $0x1c] sm:$0xf]
      %v740 = vunpack.c.l.b16 %v724
      %v741 = vunpack.c.l.b16 %v725
      %v742 = vunpack.c.l.b16 %v726
      %v743 = vunpack.c.l.b16 %v727
      %v744 = vunpack.c.l.b16 %v728
      %v745 = vunpack.c.l.b16 %v729
      %v746 = vunpack.c.l.b16 %v730
      %v747 = vunpack.c.l.b16 %v731
      %v748 = vpack.c.b16 %v741, %v740
      %v749 = vpack.c.b16 %v743, %v742
      %v750 = vpack.c.b16 %v745, %v744
      %v751 = vpack.c.b16 %v747, %v746
      %vm752 = vcmask 261120
      %v754 = vsel %vm752, %v748, 0
      %v757 = vsel %vm752, %v749, 0
      %v760 = vsel %vm752, %v750, 0
      %v763 = vsel %vm752, %v751, 0
      %765 = vmatprep.subr.bf16.mxu0 0
      %766 = vmatpush1.bf16.msra.mxu0 %v714
      %767 = vmatprep.subr.bf16.mxu0 0
      %768 = vmatpush1.bf16.msra.mxu0 %v715
      %769 = vmatprep.subr.bf16.mxu0 0
      %770 = vmatpush1.bf16.msra.mxu0 0
      %771 = vmatprep.subr.bf16.mxu0 0
      %772 = vmatpush1.bf16.msra.mxu0 0
      %773 = vmatprep.subr.bf16.mxu0 0
      %774 = vmatpush1.bf16.msra.mxu0 0
      %775 = vmatprep.subr.bf16.mxu0 0
      %776 = vmatpush1.bf16.msra.mxu0 0
      %777 = vmatprep.subr.bf16.mxu0 0
      %778 = vmatpush1.bf16.msra.mxu0 0
      %779 = vmatprep.subr.bf16.mxu0 0
      %780 = vmatpush1.bf16.msra.mxu0 0
      %781 = vmatprep.subr.bf16.mxu0 0
      %782 = vmatpush1.bf16.msra.mxu0 0
      %783 = vmatprep.subr.bf16.mxu0 0
      %784 = vmatpush1.bf16.msra.mxu0 0
      %785 = vmatprep.subr.bf16.mxu0 0
      %786 = vmatpush1.bf16.msra.mxu0 0
      %787 = vmatprep.subr.bf16.mxu0 0
      %788 = vmatpush1.bf16.msra.mxu0 0
      %789 = vmatprep.subr.bf16.mxu0 0
      %790 = vmatpush1.bf16.msra.mxu0 0
      %791 = vmatprep.subr.bf16.mxu0 0
      %792 = vmatpush1.bf16.msra.mxu0 0
      %793 = vmatprep.subr.bf16.mxu0 0
      %794 = vmatpush1.bf16.msra.mxu0 0
      %795 = vmatprep.subr.bf16.mxu0 0
      %796 = vmatpush1.bf16.msra.mxu0 0
      %797 = vmatprep.mubr.bf16.mxu0 0
      %798 = vmatmul.mubr.bf16.gmra.mrb[0].mxu0 %v754
      %v799 = vpop.f32.mrb[0].mxu0
      %v800 = vadd.f32 0.0, %v799
      %v801 = vpop.f32.mrb[0].mxu0
      %v802 = vpop.f32.mrb[0].mxu0
      %v803 = vadd.f32 0.0, %v802
      %v804 = vpop.f32.mrb[0].mxu0
      %805 = vmatprep.mubr.bf16.mxu0 0
      %806 = vmatmul.mubr.bf16.gmra.mrb[0].mxu0 %v757
      %v807 = vpop.f32.mrb[0].mxu0
      %v808 = vadd.f32 0.0, %v807
      %v809 = vpop.f32.mrb[0].mxu0
      %v810 = vpop.f32.mrb[0].mxu0
      %v811 = vadd.f32 0.0, %v810
      %v812 = vpop.f32.mrb[0].mxu0
      %813 = vmatprep.mubr.bf16.mxu0 0
      %814 = vmatmul.mubr.bf16.gmra.mrb[0].mxu0 %v760
      %v815 = vpop.f32.mrb[0].mxu0
      %v816 = vadd.f32 0.0, %v815
      %v817 = vpop.f32.mrb[0].mxu0
      %v818 = vpop.f32.mrb[0].mxu0
      %v819 = vadd.f32 0.0, %v818
      %v820 = vpop.f32.mrb[0].mxu0
      %821 = vmatprep.mubr.bf16.mxu0 0
      %822 = vmatmul.mubr.bf16.gmra.mrb[0].mxu0 %v763
      %v823 = vpop.f32.mrb[0].mxu0
      %v824 = vadd.f32 0.0, %v823
      %v825 = vpop.f32.mrb[0].mxu0
      %v826 = vpop.f32.mrb[0].mxu0
      %v827 = vadd.f32 0.0, %v826
      %v828 = vpop.f32.mrb[0].mxu0
      %829 = vdwg.mxu0
      %v838 = vunpack.c.l.b16 %v716
      %v839 = vunpack.c.l.b16 %v717
      %v840 = vunpack.c.l.b16 %v718
      %v841 = vunpack.c.l.b16 %v719
      %v842 = vunpack.c.l.b16 %v720
      %v843 = vunpack.c.l.b16 %v721
      %v844 = vunpack.c.l.b16 %v722
      %v845 = vunpack.c.l.b16 %v723
      %v846 = vpack.c.b16 %v839, %v838
      %v847 = vpack.c.b16 %v841, %v840
      %v848 = vpack.c.b16 %v843, %v842
      %v849 = vpack.c.b16 %v845, %v844
      %v851 = vsel %vm752, %v846, 0
      %v854 = vsel %vm752, %v847, 0
      %v857 = vsel %vm752, %v848, 0
      %v860 = vsel %vm752, %v849, 0
      %862 = vmatprep.subr.bf16.mxu0 0
      %863 = vmatpush1.bf16.msra.mxu0 %v712
      %864 = vmatprep.subr.bf16.mxu0 0
      %865 = vmatpush1.bf16.msra.mxu0 %v713
      %866 = vmatprep.subr.bf16.mxu0 0
      %867 = vmatpush1.bf16.msra.mxu0 0
      %868 = vmatprep.subr.bf16.mxu0 0
      %869 = vmatpush1.bf16.msra.mxu0 0
      %870 = vmatprep.subr.bf16.mxu0 0
      %871 = vmatpush1.bf16.msra.mxu0 0
      %872 = vmatprep.subr.bf16.mxu0 0
      %873 = vmatpush1.bf16.msra.mxu0 0
      %874 = vmatprep.subr.bf16.mxu0 0
      %875 = vmatpush1.bf16.msra.mxu0 0
      %876 = vmatprep.subr.bf16.mxu0 0
      %877 = vmatpush1.bf16.msra.mxu0 0
      %878 = vmatprep.subr.bf16.mxu0 0
      %879 = vmatpush1.bf16.msra.mxu0 0
      %880 = vmatprep.subr.bf16.mxu0 0
      %881 = vmatpush1.bf16.msra.mxu0 0
      %882 = vmatprep.subr.bf16.mxu0 0
      %883 = vmatpush1.bf16.msra.mxu0 0
      %884 = vmatprep.subr.bf16.mxu0 0
      %885 = vmatpush1.bf16.msra.mxu0 0
      %886 = vmatprep.subr.bf16.mxu0 0
      %887 = vmatpush1.bf16.msra.mxu0 0
      %888 = vmatprep.subr.bf16.mxu0 0
      %889 = vmatpush1.bf16.msra.mxu0 0
      %890 = vmatprep.subr.bf16.mxu0 0
      %891 = vmatpush1.bf16.msra.mxu0 0
      %892 = vmatprep.subr.bf16.mxu0 0
      %893 = vmatpush1.bf16.msra.mxu0 0
      %894 = vmatprep.mubr.bf16.mxu0 0
      %895 = vmatmul.mubr.bf16.gmra.mrb[0].mxu0 %v851
      %v896 = vpop.f32.mrb[0].mxu0
      %v897 = vadd.f32 %v800, %v896
      %v898 = vpop.f32.mrb[0].mxu0
      %v899 = vpop.f32.mrb[0].mxu0
      %v900 = vadd.f32 %v803, %v899
      %v901 = vpop.f32.mrb[0].mxu0
      %902 = vmatprep.mubr.bf16.mxu0 0
      %903 = vmatmul.mubr.bf16.gmra.mrb[0].mxu0 %v854
      %v904 = vpop.f32.mrb[0].mxu0
      %v905 = vadd.f32 %v808, %v904
      %v906 = vpop.f32.mrb[0].mxu0
      %v907 = vpop.f32.mrb[0].mxu0
      %v908 = vadd.f32 %v811, %v907
      %v909 = vpop.f32.mrb[0].mxu0
      %910 = vmatprep.mubr.bf16.mxu0 0
      %911 = vmatmul.mubr.bf16.gmra.mrb[0].mxu0 %v857
      %v912 = vpop.f32.mrb[0].mxu0
      %v913 = vadd.f32 %v816, %v912
      %v914 = vpop.f32.mrb[0].mxu0
      %v915 = vpop.f32.mrb[0].mxu0
      %v916 = vadd.f32 %v819, %v915
      %v917 = vpop.f32.mrb[0].mxu0
      %918 = vmatprep.mubr.bf16.mxu0 0
      %919 = vmatmul.mubr.bf16.gmra.mrb[0].mxu0 %v860
      %v920 = vpop.f32.mrb[0].mxu0
      %v921 = vadd.f32 %v824, %v920
      %v922 = vpop.f32.mrb[0].mxu0
      %v923 = vpop.f32.mrb[0].mxu0
      %v924 = vadd.f32 %v827, %v923
      %v925 = vpop.f32.mrb[0].mxu0
      %926 = vdwg.mxu0
      %v927 = vld [vmem:[%s6] sm:$0xff]
      %v928 = vld [vmem:[%s6 + $0x8] sm:$0xff]
      %v929 = vld [vmem:[%s6 + $0x10] sm:$0xff]
      %v930 = vld [vmem:[%s6 + $0x18] sm:$0xff]
      %v931 = vld [vmem:[%s6 + $0x20] sm:$0xff]
      %v932 = vld [vmem:[%s6 + $0x28] sm:$0xff]
      %v933 = vld [vmem:[%s6 + $0x30] sm:$0xff]
      %v934 = vld [vmem:[%s6 + $0x38] sm:$0xff]
      %936 = vset.pattern.permute.xlu0 0
      %937 = vperm.xlu0 %936, %v927
      %v938 = vpop.permute.xlu0 %937
      %941 = vset.pattern.permute.xlu0 0
      %942 = vperm.xlu0 %941, %v928
      %v943 = vpop.permute.xlu0 %942
      %946 = vset.pattern.permute.xlu0 0
      %947 = vperm.xlu0 %946, %v929
      %v948 = vpop.permute.xlu0 %947
      %951 = vset.pattern.permute.xlu0 0
      %952 = vperm.xlu0 %951, %v930
      %v953 = vpop.permute.xlu0 %952
      %956 = vset.pattern.permute.xlu0 0
      %957 = vperm.xlu0 %956, %v931
      %v958 = vpop.permute.xlu0 %957
      %961 = vset.pattern.permute.xlu0 0
      %962 = vperm.xlu0 %961, %v932
      %v963 = vpop.permute.xlu0 %962
      %966 = vset.pattern.permute.xlu0 0
      %967 = vperm.xlu0 %966, %v933
      %v968 = vpop.permute.xlu0 %967
      %971 = vset.pattern.permute.xlu0 0
      %972 = vperm.xlu0 %971, %v934
      %v973 = vpop.permute.xlu0 %972
      %v975 = vadd.f32 %v897, %v938
      %v976 = vadd.f32 %v900, %v943
      %v977 = vadd.f32 %v905, %v948
      %v978 = vadd.f32 %v908, %v953
      %v979 = vadd.f32 %v913, %v958
      %v980 = vadd.f32 %v916, %v963
      %v981 = vadd.f32 %v921, %v968
      %v982 = vadd.f32 %v924, %v973
      %v983 = vmax.f32 %v975, 0.0
      %v984 = vmax.f32 %v976, 0.0
      %v985 = vmax.f32 %v977, 0.0
      %v986 = vmax.f32 %v978, 0.0
      %v987 = vmax.f32 %v979, 0.0
      %v988 = vmax.f32 %v980, 0.0
      %v989 = vmax.f32 %v981, 0.0
      %v990 = vmax.f32 %v982, 0.0
      %v991 = vld [vmem:[%s7] sm:$0xf]
      %v992 = vld [vmem:[%s7 + $0x4] sm:$0xf]
      %v993 = vld [vmem:[%s7 + $0x8] sm:$0xf]
      %v994 = vld [vmem:[%s7 + $0xc] sm:$0xf]
      %v995 = vpack.c.bf16 %v984, %v983
      %v996 = vpack.c.bf16 %v986, %v985
      %v997 = vpack.c.bf16 %v988, %v987
      %v998 = vpack.c.bf16 %v990, %v989
      %v999 = vld [vmem:[%s8] sm:$0xff]
      %v1000 = vld [vmem:[%s8 + $0x8] sm:$0xff]
      %v1001 = vld [vmem:[%s8 + $0x10] sm:$0xff]
      %v1002 = vld [vmem:[%s8 + $0x18] sm:$0xff]
      %1004 = vset.pattern.permute.xlu0 0
      %1005 = vperm.xlu0 %1004, %v999
      %v1006 = vpop.permute.xlu0 %1005
      %1009 = vset.pattern.permute.xlu0 0
      %1010 = vperm.xlu0 %1009, %v1000
      %v1011 = vpop.permute.xlu0 %1010
      %1014 = vset.pattern.permute.xlu0 0
      %1015 = vperm.xlu0 %1014, %v1001
      %v1016 = vpop.permute.xlu0 %1015
      %1019 = vset.pattern.permute.xlu0 0
      %1020 = vperm.xlu0 %1019, %v1002
      %v1021 = vpop.permute.xlu0 %1020
      %v1027 = vunpack.c.l.b16 %v991
      %v1028 = vunpack.c.l.b16 %v992
      %v1029 = vunpack.c.l.b16 %v993
      %v1030 = vunpack.c.l.b16 %v994
      %v1031 = vpack.c.b16 %v1028, %v1027
      %v1032 = vpack.c.b16 %v1030, %v1029
      %vm1033 = vcmask 523264
      %v1035 = vsel %vm1033, %v1031, 0
      %v1038 = vsel %vm1033, %v1032, 0
      %1040 = vmatprep.subr.bf16.mxu0 0
      %1041 = vmatpush1.bf16.msra.mxu0 %v995
      %1042 = vmatprep.subr.bf16.mxu0 0
      %1043 = vmatpush1.bf16.msra.mxu0 %v996
      %1044 = vmatprep.subr.bf16.mxu0 0
      %1045 = vmatpush1.bf16.msra.mxu0 %v997
      %1046 = vmatprep.subr.bf16.mxu0 0
      %1047 = vmatpush1.bf16.msra.mxu0 %v998
      %1048 = vmatprep.subr.bf16.mxu0 0
      %1049 = vmatpush1.bf16.msra.mxu0 0
      %1050 = vmatprep.subr.bf16.mxu0 0
      %1051 = vmatpush1.bf16.msra.mxu0 0
      %1052 = vmatprep.subr.bf16.mxu0 0
      %1053 = vmatpush1.bf16.msra.mxu0 0
      %1054 = vmatprep.subr.bf16.mxu0 0
      %1055 = vmatpush1.bf16.msra.mxu0 0
      %1056 = vmatprep.subr.bf16.mxu0 0
      %1057 = vmatpush1.bf16.msra.mxu0 0
      %1058 = vmatprep.subr.bf16.mxu0 0
      %1059 = vmatpush1.bf16.msra.mxu0 0
      %1060 = vmatprep.subr.bf16.mxu0 0
      %1061 = vmatpush1.bf16.msra.mxu0 0
      %1062 = vmatprep.subr.bf16.mxu0 0
      %1063 = vmatpush1.bf16.msra.mxu0 0
      %1064 = vmatprep.subr.bf16.mxu0 0
      %1065 = vmatpush1.bf16.msra.mxu0 0
      %1066 = vmatprep.subr.bf16.mxu0 0
      %1067 = vmatpush1.bf16.msra.mxu0 0
      %1068 = vmatprep.subr.bf16.mxu0 0
      %1069 = vmatpush1.bf16.msra.mxu0 0
      %1070 = vmatprep.subr.bf16.mxu0 0
      %1071 = vmatpush1.bf16.msra.mxu0 0
      %1072 = vmatprep.mubr.bf16.mxu0 0
      %1073 = vmatmul.mubr.bf16.gmra.mrb[0].mxu0 %v1035
      %v1074 = vpop.f32.mrb[0].mxu0
      %v1075 = vadd.f32 %v1006, %v1074
      %v1076 = vpop.f32.mrb[0].mxu0
      %v1077 = vpop.f32.mrb[0].mxu0
      %v1078 = vadd.f32 %v1011, %v1077
      %v1079 = vpop.f32.mrb[0].mxu0
      %1080 = vmatprep.mubr.bf16.mxu0 0
      %1081 = vmatmul.mubr.bf16.gmra.mrb[0].mxu0 %v1038
      %v1082 = vpop.f32.mrb[0].mxu0
      %v1083 = vadd.f32 %v1016, %v1082
      %v1084 = vpop.f32.mrb[0].mxu0
      %v1085 = vpop.f32.mrb[0].mxu0
      %v1086 = vadd.f32 %v1021, %v1085
      %v1087 = vpop.f32.mrb[0].mxu0
      %1088 = vdwg.mxu0
      %v1089 = vmax.f32 %v1075, 0.0
      %v1090 = vmax.f32 %v1078, 0.0
      %v1091 = vmax.f32 %v1083, 0.0
      %v1092 = vmax.f32 %v1086, 0.0
      %v1093 = vld [vmem:[%s9] sm:$0xf]
      %v1094 = vld [vmem:[%s9 + $0x4] sm:$0xf]
      %v1095 = vpack.c.bf16 %v1090, %v1089
      %v1096 = vpack.c.bf16 %v1092, %v1091
      %v1097 = vld [vmem:[%s10] sm:$0xff]
      %v1098 = vld [vmem:[%s10 + $0x8] sm:$0xff]
      %1100 = vset.pattern.permute.xlu0 0
      %1101 = vperm.xlu0 %1100, %v1097
      %v1102 = vpop.permute.xlu0 %1101
      %1105 = vset.pattern.permute.xlu0 0
      %1106 = vperm.xlu0 %1105, %v1098
      %v1107 = vpop.permute.xlu0 %1106
      %v1111 = vunpack.c.l.b16 %v1093
      %v1112 = vunpack.c.l.b16 %v1094
      %v1113 = vpack.c.b16 %v1112, %v1111
      %v1115 = vsel %vm752, %v1113, 0
      %1117 = vmatprep.subr.bf16.mxu0 0
      %1118 = vmatpush1.bf16.msra.mxu0 %v1095
      %1119 = vmatprep.subr.bf16.mxu0 0
      %1120 = vmatpush1.bf16.msra.mxu0 %v1096
      %1121 = vmatprep.subr.bf16.mxu0 0
      %1122 = vmatpush1.bf16.msra.mxu0 0
      %1123 = vmatprep.subr.bf16.mxu0 0
      %1124 = vmatpush1.bf16.msra.mxu0 0
      %1125 = vmatprep.subr.bf16.mxu0 0
      %1126 = vmatpush1.bf16.msra.mxu0 0
      %1127 = vmatprep.subr.bf16.mxu0 0
      %1128 = vmatpush1.bf16.msra.mxu0 0
      %1129 = vmatprep.subr.bf16.mxu0 0
      %1130 = vmatpush1.bf16.msra.mxu0 0
      %1131 = vmatprep.subr.bf16.mxu0 0
      %1132 = vmatpush1.bf16.msra.mxu0 0
      %1133 = vmatprep.subr.bf16.mxu0 0
      %1134 = vmatpush1.bf16.msra.mxu0 0
      %1135 = vmatprep.subr.bf16.mxu0 0
      %1136 = vmatpush1.bf16.msra.mxu0 0
      %1137 = vmatprep.subr.bf16.mxu0 0
      %1138 = vmatpush1.bf16.msra.mxu0 0
      %1139 = vmatprep.subr.bf16.mxu0 0
      %1140 = vmatpush1.bf16.msra.mxu0 0
      %1141 = vmatprep.subr.bf16.mxu0 0
      %1142 = vmatpush1.bf16.msra.mxu0 0
      %1143 = vmatprep.subr.bf16.mxu0 0
      %1144 = vmatpush1.bf16.msra.mxu0 0
      %1145 = vmatprep.subr.bf16.mxu0 0
      %1146 = vmatpush1.bf16.msra.mxu0 0
      %1147 = vmatprep.subr.bf16.mxu0 0
      %1148 = vmatpush1.bf16.msra.mxu0 0
      %1149 = vmatprep.mubr.bf16.mxu0 0
      %1150 = vmatmul.mubr.bf16.gmra.mrb[0].mxu0 %v1115
      %v1151 = vpop.f32.mrb[0].mxu0
      %v1152 = vadd.f32 %v1102, %v1151
      %v1153 = vpop.f32.mrb[0].mxu0
      %v1154 = vpop.f32.mrb[0].mxu0
      %v1155 = vadd.f32 %v1107, %v1154
      %v1156 = vpop.f32.mrb[0].mxu0
      %1157 = vdwg.mxu0
      %v1158 = vmax.f32 %v1152, 0.0
      %v1159 = vmax.f32 %v1155, 0.0
      %v1160 = vld [vmem:[%s11] sm:$0xff]
      %v1161 = vld [vmem:[%s11 + $0x8] sm:$0xff]
      %v1162 = vld [vmem:[%s11 + $0x10] sm:$0xff]
      %v1163 = vld [vmem:[%s11 + $0x18] sm:$0xff]
      %1165 = vset.pattern.permute.xlu0 0
      %1166 = vperm.xlu0 %1165, %v1160
      %v1167 = vpop.permute.xlu0 %1166
      %1170 = vset.pattern.permute.xlu0 0
      %1171 = vperm.xlu0 %1170, %v1161
      %v1172 = vpop.permute.xlu0 %1171
      %1175 = vset.pattern.permute.xlu0 0
      %1176 = vperm.xlu0 %1175, %v1162
      %v1177 = vpop.permute.xlu0 %1176
      %1180 = vset.pattern.permute.xlu0 0
      %1181 = vperm.xlu0 %1180, %v1163
      %v1182 = vpop.permute.xlu0 %1181
      %v1184 = vmul.f32 %v708, %v1167
      %v1185 = vmul.f32 %v709, %v1172
      %v1186 = vmul.f32 %v710, %v1177
      %v1187 = vmul.f32 %v711, %v1182
      %v1188 = vsel %vm525, %v1184, 0.0
      %v1189 = vsel %vm525, %v1185, 0.0
      %v1190 = vadd.f32 %v1188, %v1189
      %v1191 = vsel %vm525, %v1186, 0.0
      %v1192 = vadd.f32 %v1190, %v1191
      %v1193 = vsel %vm525, %v1187, 0.0
      %v1194 = vadd.f32 %v1192, %v1193
      %v1195 = vrot.slane %v1194, 4
      %v1196 = vadd.f32 %v1194, %v1195
      %v1197 = vrot.slane %v1196, 2
      %v1198 = vadd.f32 %v1196, %v1197
      %v1199 = vrot.slane %v1198, 1
      %v1200 = vadd.f32 %v1198, %v1199
      %v1201 = vld [vmem:[%s12] sm:$0xff]
      %v1202 = vld [vmem:[%s12 + $0x8] sm:$0xff]
      %1204 = vset.pattern.permute.xlu0 0
      %1205 = vperm.xlu0 %1204, %v1201
      %v1206 = vpop.permute.xlu0 %1205
      %1209 = vset.pattern.permute.xlu0 0
      %1210 = vperm.xlu0 %1209, %v1202
      %v1211 = vpop.permute.xlu0 %1210
      %v1213 = vmul.f32 %v1158, %v1206
      %v1214 = vmul.f32 %v1159, %v1211
      %v1215 = vsel %vm525, %v1213, 0.0
      %v1216 = vsel %vm525, %v1214, 0.0
      %v1217 = vadd.f32 %v1215, %v1216
      %v1218 = vrot.slane %v1217, 4
      %v1219 = vadd.f32 %v1217, %v1218
      %v1220 = vrot.slane %v1219, 2
      %v1221 = vadd.f32 %v1219, %v1220
      %v1222 = vrot.slane %v1221, 1
      %v1223 = vadd.f32 %v1221, %v1222
      %v1224 = vadd.f32 %v1200, %v1223
      %s1225 = sld [smem:[#allocation2]]
      %v1226 = vstv %s1225
      %v1227 = vadd.f32 %v1224, %v1226
      %v1228 = vxor.u32 %v1227, 2147483648
      %v1229 = vmul.f32 %v1228, 1.442695
      %v1230 = vpow.pop %v1229
      %v1231 = vadd.f32 %v1230, 1.0
      %v1232 = vrcp.pop %v1231
      %v1233 = vmul.f32 1.0, %v1232
      %vm1234 = vcmask 122880
      %1235 = vst.msk [vmem:[%s472] sm:$0x1] %vm1234, %v1233
      %p1236 = scmp.lt.s32.totalorder %s26, 2
      %s1237 = scalar_select %p1236, %s26, 2
      %s1238 = scalar_lea.vmem %s14, %s1237
      // Predicated region
      $region77: #{neural_mf_forward.1} parent=75 // pred_check
        %p1239 = pneg %p348
      $region78: #{neural_mf_forward.1} parent=75 // pred_check_branch
        %1241 = sbr.rel (%p1239) target = $region80
      $region79: #{neural_mf_forward.1} parent=75 // pred_region
        _
      $region80: #{neural_mf_forward.1} parent=75 // pred_fallthru
        _
    $region76: #{neural_mf_forward.1} parent=5 // pred_fallthru
      _
    %p1242 = scmp.le.s32.totalorder 2, %s21
    // Predicated region
    $region81: #{neural_mf_forward.1} parent=5 // pred_check
      %p1243 = pneg %p1242
    $region82: #{neural_mf_forward.1} parent=5 // pred_check_branch
      %1245 = sbr.rel (%p1243) target = $region84
    $region83: #{neural_mf_forward.1} parent=5 // pred_region
      %s1246 = ssub.s32 %s21, 2
      // Predicated region
      $region85: #{neural_mf_forward.1} parent=83 // pred_check
        %p1247 = pneg %p354
      $region86: #{neural_mf_forward.1} parent=83 // pred_check_branch
        %1249 = sbr.rel (%p1247) target = $region88
      $region87: #{neural_mf_forward.1} parent=83 // pred_region
        %p1250 = scmp.lt.s32.totalorder %s27, 2
        %s1251 = scalar_select %p1250, %s27, 2
        %s1252 = scalar_lea.vmem %s14, %s1251
      $region88: #{neural_mf_forward.1} parent=83 // pred_fallthru
        _
    $region84: #{neural_mf_forward.1} parent=5 // pred_fallthru
      _
  $region6: #{neural_mf_forward.1} parent=0 // loop_footer
    %s25 = sadd.s32 1, %s21
  $region7: #{neural_mf_forward.1} parent=0 // loop_footer_branch
    %20 = sbr.rel target = $region3
  $region8: #{neural_mf_forward.1} parent=0 // loop_exit
    _

</llo_original>
